<compile_context>
chip_gen: v5e
topology: v5e:2x2
jax: 0.10.0
libtpu: 0.0.40
codegen_flags: <defaults>
</compile_context>

<pallas_src>
import jax
import jax.numpy as jnp
from jax import lax
from jax.experimental import pallas as pl
from jax.experimental.pallas import tpu as pltpu


_LANE = 128          # lane width of a vreg
_STRIPE = 128        # sublane stripe for the fused pass (16 vregs per block)
_BIG = 1.0e30        # sentinel squared-norm for padded/ignored points


def _round_up(a, b):
    return -(-a // b) * b


def _chamfer_kernel(x_ref, y_ref, xx_ref, yy_ref, d1_ref, d2_ref, colmin_ref):
    """One (b, n, m) grid step.

    x_ref  : (3, TN)    lane-dense -2*x tile (xyz on sublanes, -2 folded in)
    y_ref  : (3, TM)    lane-dense y tile
    xx_ref : (TN, 1)    ||x||^2 (padded / ignored rows carry _BIG)
    yy_ref : (1, TM)    ||y||^2 (padded / ignored cols carry _BIG)
    d1_ref : (1, TN)    per-x nearest L2 distance (written at last m step)
    d2_ref : (1, 1, TM) per-(n,m)-tile column min of squared distance
    colmin_ref : (TN, 128) running lane-group min of squared distance over m
    """
    m_idx = pl.program_id(2)

    @pl.when(m_idx == 0)
    def _():
        colmin_ref[...] = jnp.full(colmin_ref.shape, _BIG, colmin_ref.dtype)

    # Cross term on the MXU: x_ref already carries the -2 factor, so
    # xy2[i, j] = -2 * x_i . y_j.  Precision pinned explicitly (f32 multi-pass).
    xy2 = lax.dot_general(
        x_ref[...], y_ref[...],
        dimension_numbers=(((0,), (0,)), ((), ())),
        preferred_element_type=jnp.float32,
        precision=lax.Precision.HIGHEST,
    )                                                          # (TN, TM)

    xx = xx_ref[...]                                           # (TN, 1)
    yy = yy_ref[...]                                           # (1, TM)

    tn, tm = xy2.shape
    stripe = min(_STRIPE, tn)
    n_stripes = tn // stripe
    n_chunks = tm // _LANE

    # Fused single pass over xy2.  Per (stripe x 128) register block:
    #   g   = ||x||^2 + ||y||^2 - 2 x.y      (squared distance, built once)
    #   d1  : colmin accumulator <- min(colmin, g)          (VPU)
    #   d2  : column min over rows of g                     (VPU tree + XLU)
    # colmin_ref is loaded/stored once per stripe; d2_ref is RMW-min'ed across
    # stripes (tiny traffic vs. the xy2 slab read).
    for r in range(n_stripes):
        rs = slice(r * stripe, (r + 1) * stripe)
        acc = colmin_ref[rs, :]                                # (stripe, 128)
        xx_b = jnp.broadcast_to(xx[rs, :], (stripe, _LANE))    # hoisted broadcast
        for c in range(n_chunks):
            cs = slice(c * _LANE, (c + 1) * _LANE)
            g = (yy[:, cs] + xy2[rs, cs]) + xx_b               # (stripe, 128)
            acc = jnp.minimum(acc, g)
            col = jnp.min(g, axis=0, keepdims=True).reshape(1, 1, _LANE)
            if r == 0:
                d2_ref[:, :, cs] = col
            else:
                d2_ref[:, :, cs] = jnp.minimum(d2_ref[:, :, cs], col)
        colmin_ref[rs, :] = acc

    @pl.when(m_idx == pl.num_programs(2) - 1)
    def _():
        # Single cross-lane (XLU) reduce + sqrt per N-tile.
        row_min = jnp.min(colmin_ref[...], axis=1)             # (TN,)
        d1_ref[...] = jnp.sqrt(jnp.maximum(row_min, 0.0)).reshape(d1_ref.shape)


def _default_tiles():
    """Per-generation (tn, tm, vmem_limit_bytes) defaults."""
    try:
        vmem_cap = pltpu.get_tpu_info().vmem_capacity_bytes
    except Exception:
        vmem_cap = None
    if vmem_cap is not None and vmem_cap >= 96 * 1024 * 1024:
        # v5e / v6e: 128 MiB VMEM -> big tiles (xy2 slab = 16 MiB at 1024x4096).
        return 1024, 4096, 100 * 1024 * 1024
    # v7x (64 MiB per TensorCore) or unknown: keep headroom under the ceiling.
    return 512, 4096, 52 * 1024 * 1024


def chamfer_min_dists(xyz1, xyz2, *, valid1=None, valid2=None,
                      tn_max=None, tm_max=None, vmem_limit_bytes=None):
    """Per-point nearest-neighbor L2 distances:
       (B, N) for xyz1 -> xyz2 and (B, M) for xyz2 -> xyz1.

    valid1/valid2: optional (B, N)/(B, M) boolean masks; invalid points get a
    sentinel norm so they never win a nearest-neighbor min (their own output
    entries are garbage and must be masked by the caller).
    """
    B, N, C = xyz1.shape
    B2, M, C2 = xyz2.shape
    assert B == B2 and C == 3 and C2 == 3

    d_tn, d_tm, d_vmem = _default_tiles()
    tn_max = d_tn if tn_max is None else tn_max
    tm_max = d_tm if tm_max is None else tm_max
    vmem_limit_bytes = d_vmem if vmem_limit_bytes is None else vmem_limit_bytes
    tn_max = _round_up(max(tn_max, _LANE), _LANE)
    tm_max = _round_up(max(tm_max, _LANE), _LANE)

    x32 = xyz1.astype(jnp.float32)
    y32 = xyz2.astype(jnp.float32)

    n_pad = _round_up(N, _LANE)
    tn = min(tn_max, n_pad)
    n_pad = _round_up(n_pad, tn)
    m_pad = _round_up(M, _LANE)
    tm = min(tm_max, m_pad)
    m_pad = _round_up(m_pad, tm)
    n_tiles = n_pad // tn
    m_tiles = m_pad // tm

    # Lane-dense (B, 3, N/M) MXU operands; -2 folded into x once per call.
    x_t = jnp.pad(jnp.transpose(x32 * (-2.0), (0, 2, 1)),
                  ((0, 0), (0, 0), (0, n_pad - N)))
    y_t = jnp.pad(jnp.transpose(y32, (0, 2, 1)),
                  ((0, 0), (0, 0), (0, m_pad - M)))

    # Squared norms; padded / masked points carry a huge sentinel so they can
    # never win a min -- no in-kernel masking needed.
    xx = jnp.sum(x32 * x32, axis=-1)
    yy = jnp.sum(y32 * y32, axis=-1)
    if valid1 is not None:
        xx = jnp.where(valid1, xx, _BIG)
    if valid2 is not None:
        yy = jnp.where(valid2, yy, _BIG)
    xx = jnp.pad(xx, ((0, 0), (0, n_pad - N)), constant_values=_BIG)[:, :, None]
    yy = jnp.pad(yy, ((0, 0), (0, m_pad - M)), constant_values=_BIG)[:, None, :]

    d1, d2_part = pl.pallas_call(
        _chamfer_kernel,
        out_shape=(
            jax.ShapeDtypeStruct((B, 1, n_pad), jnp.float32),
            jax.ShapeDtypeStruct((B, n_tiles * m_tiles, 1, tm), jnp.float32),
        ),
        grid_spec=pltpu.PrefetchScalarGridSpec(
            num_scalar_prefetch=0,
            grid=(B, n_tiles, m_tiles),
            in_specs=[
                pl.BlockSpec((None, 3, tn), lambda b, n, m: (b, 0, n)),
                pl.BlockSpec((None, 3, tm), lambda b, n, m: (b, 0, m)),
                pl.BlockSpec((None, tn, 1), lambda b, n, m: (b, n, 0)),
                pl.BlockSpec((None, 1, tm), lambda b, n, m: (b, 0, m)),
            ],
            out_specs=[
                pl.BlockSpec((None, 1, tn), lambda b, n, m: (b, 0, n)),
                pl.BlockSpec((None, 1, 1, tm),
                             lambda b, n, m: (b, n * m_tiles + m, 0, 0)),
            ],
            scratch_shapes=[pltpu.VMEM((tn, _LANE), jnp.float32)],
        ),
        compiler_params=pltpu.CompilerParams(
            dimension_semantics=("parallel", "parallel", "arbitrary"),
            vmem_limit_bytes=vmem_limit_bytes,
        ),
    )(x_t, y_t, xx, yy)

    d1 = d1.reshape(B, n_pad)[:, :N]                              # sqrt in-kernel
    d2_sq = jnp.min(d2_part.reshape(B, n_tiles, m_pad), axis=1)   # min over N-tiles
    d2 = jnp.sqrt(jnp.maximum(d2_sq, 0.0))[:, :M]
    return d1, d2


def chamfer_distance_l1(xyz1, xyz2, ignore_zeros=False):
    """Equivalent of ChamferDistanceL1.forward."""
    B = xyz1.shape[0]
    if ignore_zeros and B == 1:
        # Zero-sum points are excluded via sentinel norms (never chosen as a
        # nearest neighbor) and a masked mean -- static shapes, no gather.
        valid1 = jnp.sum(xyz1, axis=2) != 0                      # (1, N)
        valid2 = jnp.sum(xyz2, axis=2) != 0                      # (1, M)
        d1, d2 = chamfer_min_dists(xyz1, xyz2, valid1=valid1, valid2=valid2)
        c1 = jnp.maximum(jnp.sum(valid1).astype(jnp.float32), 1.0)
        c2 = jnp.maximum(jnp.sum(valid2).astype(jnp.float32), 1.0)
        m1 = jnp.sum(jnp.where(valid1, d1, 0.0)) / c1
        m2 = jnp.sum(jnp.where(valid2, d2, 0.0)) / c2
        return (m1 + m2) / 2.0
    d1, d2 = chamfer_min_dists(xyz1, xyz2)
    return (jnp.mean(d1) + jnp.mean(d2)) / 2.0
    # TODO(synk): backward (ChamferFunction.backward) is not implemented; this
    # is the forward loss only.


def _reference(xyz1, xyz2):
    # Pure-JAX reference for sanity checks.
    diff = xyz1[:, :, None, :] - xyz2[:, None, :, :]              # (B, N, M, 3)
    d = jnp.sum(diff * diff, axis=-1)                             # (B, N, M)
    d1 = jnp.sqrt(jnp.min(d, axis=2))
    d2 = jnp.sqrt(jnp.min(d, axis=1))
    return (jnp.mean(d1) + jnp.mean(d2)) / 2.0


if __name__ == "__main__":
    key = jax.random.PRNGKey(0)
    k1, k2, k3, k4, k5, k6 = jax.random.split(key, 6)

    # 1) Small single-tile case (ragged padding 16 / 24 -> 128 lanes).
    B, N, M = 2, 16, 24
    xyz1 = jax.random.normal(k1, (B, N, 3), dtype=jnp.float32)
    xyz2 = jax.random.normal(k2, (B, M, 3), dtype=jnp.float32)
    out = jax.block_until_ready(chamfer_distance_l1(xyz1, xyz2))
    ref = _reference(xyz1, xyz2)
    assert jnp.allclose(out, ref, atol=1e-4, rtol=1e-4), (out, ref)

    # 2) Multi-tile case: small tile caps force a 2x3 (N, M)-tile grid with
    #    2 sublane stripes and 2 lane chunks per tile (exercises the colmin
    #    accumulator across M tiles, the d2 RMW across stripes, the wrapper
    #    min over N-tiles and sentinel padding).
    xyz1b = jax.random.normal(k3, (1, 300, 3), dtype=jnp.float32)
    xyz2b = jax.random.normal(k4, (1, 700, 3), dtype=jnp.float32)
    d1b, d2b = chamfer_min_dists(xyz1b, xyz2b, tn_max=256, tm_max=256)
    out2 = jax.block_until_ready((jnp.mean(d1b) + jnp.mean(d2b)) / 2.0)
    ref2 = _reference(xyz1b, xyz2b)
    assert jnp.allclose(out2, ref2, atol=1e-4, rtol=1e-4), (out2, ref2)

    # 3) ignore_zeros=True (batch_size == 1): trailing all-zero points must be
    #    excluded from both the neighbor search and the means.
    n_real1, n_zero1 = 40, 9
    n_real2, n_zero2 = 55, 6
    p1 = jax.random.normal(k5, (1, n_real1, 3), dtype=jnp.float32) + 1.0
    p2 = jax.random.normal(k6, (1, n_real2, 3), dtype=jnp.float32) + 1.0
    z1 = jnp.concatenate([p1, jnp.zeros((1, n_zero1, 3), jnp.float32)], axis=1)
    z2 = jnp.concatenate([p2, jnp.zeros((1, n_zero2, 3), jnp.float32)], axis=1)
    out3 = jax.block_until_ready(chamfer_distance_l1(z1, z2, ignore_zeros=True))
    ref3 = _reference(p1, p2)
    assert jnp.allclose(out3, ref3, atol=1e-4, rtol=1e-4), (out3, ref3)

    print("KERNEL_OK")
</pallas_src>

<mosaic_0001>
module attributes {stable_mosaic.version = 11 : i64} {
  func.func @_chamfer_kernel(%arg0: i32, %arg1: i32, %arg2: i32, %arg3: memref<1x3x128xf32, #tpu.memory_space<vmem>>, %arg4: memref<1x3x128xf32, #tpu.memory_space<vmem>>, %arg5: memref<1x128x1xf32, #tpu.memory_space<vmem>>, %arg6: memref<1x1x128xf32, #tpu.memory_space<vmem>>, %arg7: memref<1x1x128xf32, #tpu.memory_space<vmem>>, %arg8: memref<1x1x1x128xf32, #tpu.memory_space<vmem>>, %arg9: memref<128x128xf32, #tpu.memory_space<vmem>>) attributes {dimension_semantics = [#tpu.dimension_semantics<parallel>, #tpu.dimension_semantics<parallel>, #tpu.dimension_semantics<arbitrary>], iteration_bounds = array<i64: 2, 1, 1>, scalar_prefetch = 0 : i64, scratch_operands = 1 : i64, tpu.core_type = #tpu.core_type<tc>, window_params = [{transform_indices = @transform_0, window_bounds = array<i64: 1, 3, 128>}, {transform_indices = @transform_1, window_bounds = array<i64: 1, 3, 128>}, {transform_indices = @transform_2, window_bounds = array<i64: 1, 128, 1>}, {transform_indices = @transform_3, window_bounds = array<i64: 1, 1, 128>}, {transform_indices = @transform_4, window_bounds = array<i64: 1, 1, 128>}, {transform_indices = @transform_5, window_bounds = array<i64: 1, 1, 1, 128>}]} {
    %c0_i32 = arith.constant 0 : i32
    %0 = arith.cmpi eq, %arg2, %c0_i32 : i32
    %1 = arith.extui %0 : i1 to i32
    %c0_i32_0 = arith.constant 0 : i32
    %2 = arith.cmpi ne, %1, %c0_i32_0 : i32
    scf.if %2 {
      %cst_23 = arith.constant 1.000000e+30 : f32
      %29 = vector.broadcast %cst_23 : f32 to vector<128x128xf32>
      %c0_24 = arith.constant 0 : index
      %c0_25 = arith.constant 0 : index
      %30 = vector.load %arg9[%c0_24, %c0_25] : memref<128x128xf32, #tpu.memory_space<vmem>>, vector<128x128xf32>
      tpu.vector_store %arg9[%c0_24, %c0_25], %29 {strides = array<i32>} : memref<128x128xf32, #tpu.memory_space<vmem>>, vector<128x128xf32>,
    } else {
    }
    %c0 = arith.constant 0 : index
    %c0_1 = arith.constant 0 : index
    %c0_2 = arith.constant 0 : index
    %3 = vector.load %arg3[%c0, %c0_1, %c0_2] : memref<1x3x128xf32, #tpu.memory_space<vmem>>, vector<1x3x128xf32>
    %4 = vector.shape_cast %3 : vector<1x3x128xf32> to vector<3x128xf32>
    %c0_3 = arith.constant 0 : index
    %c0_4 = arith.constant 0 : index
    %c0_5 = arith.constant 0 : index
    %5 = vector.load %arg4[%c0_3, %c0_4, %c0_5] : memref<1x3x128xf32, #tpu.memory_space<vmem>>, vector<1x3x128xf32>
    %6 = vector.shape_cast %5 : vector<1x3x128xf32> to vector<3x128xf32>
    %cst = arith.constant dense<0.000000e+00> : vector<128x128xf32>
    %7 = tpu.matmul %4, %6, %cst {dimension_numbers = #tpu.dot_dimension_numbers<[0], [0], [1], [1], [0, 1, 1, 1], [], []>, precision = #tpu.contract_precision<fp32>} : vector<3x128xf32>, vector<3x128xf32>, vector<128x128xf32> -> vector<128x128xf32>
    %c0_6 = arith.constant 0 : index
    %c0_7 = arith.constant 0 : index
    %c0_8 = arith.constant 0 : index
    %8 = vector.load %arg5[%c0_6, %c0_7, %c0_8] : memref<1x128x1xf32, #tpu.memory_space<vmem>>, vector<1x128x1xf32>
    %9 = vector.shape_cast %8 : vector<1x128x1xf32> to vector<128x1xf32>
    %c0_9 = arith.constant 0 : index
    %c0_10 = arith.constant 0 : index
    %c0_11 = arith.constant 0 : index
    %10 = vector.load %arg6[%c0_9, %c0_10, %c0_11] : memref<1x1x128xf32, #tpu.memory_space<vmem>>, vector<1x1x128xf32>
    %11 = vector.shape_cast %10 : vector<1x1x128xf32> to vector<1x128xf32>
    %c0_12 = arith.constant 0 : index
    %c0_13 = arith.constant 0 : index
    %12 = vector.load %arg9[%c0_12, %c0_13] : memref<128x128xf32, #tpu.memory_space<vmem>>, vector<128x128xf32>
    %13 = vector.shape_cast %9 : vector<128x1xf32> to vector<128x1xf32>
    %14 = vector.broadcast %13 : vector<128x1xf32> to vector<128x128xf32>
    %15 = vector.broadcast %11 : vector<1x128xf32> to vector<128x128xf32>
    %16 = arith.addf %15, %7 : vector<128x128xf32>
    %17 = arith.addf %16, %14 : vector<128x128xf32>
    %18 = arith.minimumf %12, %17 : vector<128x128xf32>
    %cst_14 = arith.constant dense<0x7F800000> : vector<128xf32>
    %19 = vector.multi_reduction <minimumf>, %17, %cst_14 [0] : vector<128x128xf32> to vector<128xf32>
    %20 = vector.shape_cast %19 : vector<128xf32> to vector<1x128xf32>
    %21 = vector.shape_cast %20 : vector<1x128xf32> to vector<1x1x128xf32>
    %c0_15 = arith.constant 0 : index
    %c0_16 = arith.constant 0 : index
    %c0_17 = arith.constant 0 : index
    %c0_18 = arith.constant 0 : index
    %22 = vector.load %arg8[%c0_15, %c0_16, %c0_17, %c0_18] : memref<1x1x1x128xf32, #tpu.memory_space<vmem>>, vector<1x1x1x128xf32>
    %23 = vector.shape_cast %22 : vector<1x1x1x128xf32> to vector<1x1x128xf32>
    %24 = vector.shape_cast %21 : vector<1x1x128xf32> to vector<1x1x1x128xf32>
    tpu.vector_store %arg8[%c0_15, %c0_16, %c0_17, %c0_18], %24 {strides = array<i32>} : memref<1x1x1x128xf32, #tpu.memory_space<vmem>>, vector<1x1x1x128xf32>,
    %c0_19 = arith.constant 0 : index
    %c0_20 = arith.constant 0 : index
    %25 = vector.load %arg9[%c0_19, %c0_20] : memref<128x128xf32, #tpu.memory_space<vmem>>, vector<128x128xf32>
    tpu.vector_store %arg9[%c0_19, %c0_20], %18 {strides = array<i32>} : memref<128x128xf32, #tpu.memory_space<vmem>>, vector<128x128xf32>,
    %c0_i32_21 = arith.constant 0 : i32
    %26 = arith.cmpi eq, %arg2, %c0_i32_21 : i32
    %27 = arith.extui %26 : i1 to i32
    %c0_i32_22 = arith.constant 0 : i32
    %28 = arith.cmpi ne, %27, %c0_i32_22 : i32
    scf.if %28 {
      %c0_23 = arith.constant 0 : index
      %c0_24 = arith.constant 0 : index
      %29 = vector.load %arg9[%c0_23, %c0_24] : memref<128x128xf32, #tpu.memory_space<vmem>>, vector<128x128xf32>
      %cst_25 = arith.constant dense<0x7F800000> : vector<128xf32>
      %30 = vector.multi_reduction <minimumf>, %29, %cst_25 [1] : vector<128x128xf32> to vector<128xf32>
      %cst_26 = arith.constant 0.000000e+00 : f32
      %31 = vector.broadcast %cst_26 : f32 to vector<128xf32>
      %32 = arith.maximumf %30, %31 : vector<128xf32>
      %33 = math.sqrt %32 : vector<128xf32>
      %34 = vector.shape_cast %33 : vector<128xf32> to vector<1x128xf32>
      %c0_27 = arith.constant 0 : index
      %c0_28 = arith.constant 0 : index
      %c0_29 = arith.constant 0 : index
      %35 = vector.load %arg7[%c0_27, %c0_28, %c0_29] : memref<1x1x128xf32, #tpu.memory_space<vmem>>, vector<1x1x128xf32>
      %36 = vector.shape_cast %35 : vector<1x1x128xf32> to vector<1x128xf32>
      %37 = vector.shape_cast %34 : vector<1x128xf32> to vector<1x1x128xf32>
      tpu.vector_store %arg7[%c0_27, %c0_28, %c0_29], %37 {strides = array<i32>} : memref<1x1x128xf32, #tpu.memory_space<vmem>>, vector<1x1x128xf32>,
    } else {
    }
    return
  }
  func.func @transform_0(%arg0: i32, %arg1: i32, %arg2: i32) -> (i32, i32, i32) {
    %c0_i32 = arith.constant 0 : i32
    %c0_i32_0 = arith.constant 0 : i32
    return %arg0, %c0_i32, %arg1 : i32, i32, i32
  }
  func.func @transform_1(%arg0: i32, %arg1: i32, %arg2: i32) -> (i32, i32, i32) {
    %c0_i32 = arith.constant 0 : i32
    %c0_i32_0 = arith.constant 0 : i32
    return %arg0, %c0_i32, %arg2 : i32, i32, i32
  }
  func.func @transform_2(%arg0: i32, %arg1: i32, %arg2: i32) -> (i32, i32, i32) {
    %c0_i32 = arith.constant 0 : i32
    %c0_i32_0 = arith.constant 0 : i32
    return %arg0, %arg1, %c0_i32 : i32, i32, i32
  }
  func.func @transform_3(%arg0: i32, %arg1: i32, %arg2: i32) -> (i32, i32, i32) {
    %c0_i32 = arith.constant 0 : i32
    %c0_i32_0 = arith.constant 0 : i32
    return %arg0, %c0_i32, %arg2 : i32, i32, i32
  }
  func.func @transform_4(%arg0: i32, %arg1: i32, %arg2: i32) -> (i32, i32, i32) {
    %c0_i32 = arith.constant 0 : i32
    %c0_i32_0 = arith.constant 0 : i32
    return %arg0, %c0_i32, %arg1 : i32, i32, i32
  }
  func.func @transform_5(%arg0: i32, %arg1: i32, %arg2: i32) -> (i32, i32, i32, i32) {
    %c1_i32 = arith.constant 1 : i32
    %0 = arith.muli %arg1, %c1_i32 : i32
    %1 = arith.addi %0, %arg2 : i32
    %c0_i32 = arith.constant 0 : i32
    %c0_i32_0 = arith.constant 0 : i32
    %c0_i32_1 = arith.constant 0 : i32
    return %arg0, %1, %c0_i32, %c0_i32_0 : i32, i32, i32, i32
  }
}

</mosaic_0001>

<llo_original>
// kernel: tpu_custom_call.1
$region0: #{tpu_custom_call.1}
  #allocation0 [shape = 'u32[]', space=smem, size = 0x4, offset = 0x4, fixed_abs, tag = 'smem constant byte address 0x4 - core index']
  #allocation1 [shape = 'u32[72,128]{1,0:T(1,128)}', space=vmem, size = 0x9000, scoped, tag = 'internal scratch']
  #allocation2 [shape = 'f32[128,128]{1,0:T(8,128)}', space=vmem, size = 0x10000, scoped, tag = 'scratch operand']
  %s0 = inlined_call_operand.vmem [shape: f32[2,3,128], index: 0, kind: input, shape index: {}]
  %s1 = inlined_call_operand.vmem [shape: f32[2,3,128], index: 1, kind: input, shape index: {}]
  %s2 = inlined_call_operand.vmem [shape: f32[2,128,1], index: 2, kind: input, shape index: {}]
  %s3 = inlined_call_operand.vmem [shape: f32[2,1,128], index: 3, kind: input, shape index: {}]
  %s4 = inlined_call_operand.hbm [shape: f32[2,1,128], index: 4, kind: output, shape index: {0}]
  %s5 = inlined_call_operand.hbm [shape: f32[2,1,1,128], index: 5, kind: output, shape index: {1}]
  %6 = xla_tuple %s4, %s5
  %s7 = sld [smem:[#allocation0]]
  $region65: #{tpu_custom_call.1} parent=0
    _
  %s9 = ssub.s32 1, %s7
  %s10 = scalar_select 0, %s9, %s7
  $region1: #{tpu_custom_call.1} parent=0
    #allocation3 [shape = 'u8[1024]{0}', space=vmem, size = 0x400, scoped, tag = 'output window, operand 0']
    #allocation4 [shape = 's32[2]{0}', space=sflag, size = 0x8, scoped, tag = 'scoped memory for tpu_custom_call.1']
    #allocation5 [shape = 'u8[1024]{0}', space=vmem, size = 0x400, scoped, tag = 'output window, operand 1']
    #allocation6 [shape = 's32[2]{0}', space=sflag, size = 0x8, scoped, tag = 'scoped memory for tpu_custom_call.1']
    %11 = vsyncpa [#allocation4], 0
    %s12 = scalar_lea.sflag [#allocation4], 1
    %13 = vsyncpa %s12, 0
    %14 = vsyncpa [#allocation6], 0
    %s15 = scalar_lea.sflag [#allocation6], 1
    %16 = vsyncpa %s15, 0
    loop: start=0, step=1, limit=4
    $region2: #{tpu_custom_call.1} parent=1 // loop_pre_header
      _
    $region3: #{tpu_custom_call.1} parent=1 // loop_header
      %s18 = sphi 0, %s22
      %p19 = scmp.ge.s32.totalorder %s18, 4
      %s25 = sphi 0, %s44
      %s26 = sphi 0, %s40
      %s27 = sphi 0, %s36
      %s28 = sphi 0, %s25
      %s29 = sphi 0, %s26
      %s30 = sphi 0, %s27
      %s31 = sphi 0, %s28
      %s32 = sphi 0, %s29
      %s33 = sphi 0, %s30
      %s49 = sphi 0, %s51
      %s52 = sphi 0, %s49
      %s53 = sphi 0, %s52
      %s69 = sphi 0, %s53
      %s77 = sphi 0, %s79
      %s80 = sphi 0, %s77
      %s81 = sphi 0, %s80
      %s97 = sphi 0, %s81
      %s105 = sphi 0, %s107
      %s108 = sphi 0, %s105
      %s109 = sphi 0, %s108
      %s125 = sphi 0, %s109
      %s133 = sphi 0, %s135
      %s136 = sphi 0, %s133
      %s137 = sphi 0, %s136
      %s153 = sphi 0, %s137
      %s161 = sphi 0, %s163
      %s164 = sphi 0, %s161
      %s165 = sphi 0, %s164
      %s181 = sphi 0, %s165
      %s191 = sphi 0, %s193
      %s194 = sphi 0, %s191
      %s195 = sphi 0, %s194
      %s211 = sphi 0, %s195
    $region4: #{tpu_custom_call.1} parent=1 // loop_header_branch
      %21 = sbr.rel (%p19) target = $region8
    $region5: #{tpu_custom_call.1} parent=1 // loop_body
      %s23 = ssub.s32 %s18, 1
      %s24 = ssub.s32 %s18, 2
      %s34 = sadd.s32 1, %s27
      %p35 = scmp.ge.s32.totalorder %s34, 1
      %s36 = scalar_select %p35, 0, %s34
      %s37 = sadd.s32 1, %s26
      %s38 = scalar_select %p35, %s37, %s26
      %p39 = scmp.ge.s32.totalorder %s38, 1
      %s40 = scalar_select %p39, 0, %s38
      %s41 = sadd.s32 1, %s25
      %s42 = scalar_select %p39, %s41, %s25
      %p43 = scmp.ge.s32.totalorder %s42, 2
      %s44 = scalar_select %p43, 0, %s42
      %s45 = ssub.s32 %s25, %s44
      %s46 = ssub.s32 %s26, %s40
      %s47 = sor.u32 %s45, %s46
      %p48 = scmp.eq.s32.totalorder %s47, 0
      %s50 = sadd.s32 %s49, 1
      %s51 = scalar_select %p48, %s49, %s50
      %p54 = pneg %p48
      %p55 = scmp.eq.s32.totalorder %s18, 1
      %p56 = por %p54, %p55
      %p57 = scmp.ne.s32.totalorder %s49, %s52
      %p58 = scmp.eq.s32.totalorder %s18, 0
      %p59 = por %p57, %p58
      %p60 = scmp.ne.s32.totalorder %s49, %s52
      %p61 = scmp.eq.s32.totalorder %s23, 1
      %p62 = por %p60, %p61
      %p63 = scmp.ne.s32.totalorder %s52, %s53
      %p64 = scmp.eq.s32.totalorder %s23, 0
      %p65 = por %p63, %p64
      %p66 = scmp.ne.s32.totalorder %s52, %s53
      %p67 = scmp.eq.s32.totalorder %s24, 1
      %p68 = por %p66, %p67
      %p70 = scmp.ne.s32.totalorder %s53, %s69
      %p71 = scmp.eq.s32.totalorder %s24, 0
      %p72 = por %p70, %p71
      %s73 = ssub.s32 %s25, %s44
      %s74 = ssub.s32 %s27, %s36
      %s75 = sor.u32 %s73, %s74
      %p76 = scmp.eq.s32.totalorder %s75, 0
      %s78 = sadd.s32 %s77, 1
      %s79 = scalar_select %p76, %s77, %s78
      %p82 = pneg %p76
      %p83 = scmp.eq.s32.totalorder %s18, 1
      %p84 = por %p82, %p83
      %p85 = scmp.ne.s32.totalorder %s77, %s80
      %p86 = scmp.eq.s32.totalorder %s18, 0
      %p87 = por %p85, %p86
      %p88 = scmp.ne.s32.totalorder %s77, %s80
      %p89 = scmp.eq.s32.totalorder %s23, 1
      %p90 = por %p88, %p89
      %p91 = scmp.ne.s32.totalorder %s80, %s81
      %p92 = scmp.eq.s32.totalorder %s23, 0
      %p93 = por %p91, %p92
      %p94 = scmp.ne.s32.totalorder %s80, %s81
      %p95 = scmp.eq.s32.totalorder %s24, 1
      %p96 = por %p94, %p95
      %p98 = scmp.ne.s32.totalorder %s81, %s97
      %p99 = scmp.eq.s32.totalorder %s24, 0
      %p100 = por %p98, %p99
      %s101 = ssub.s32 %s25, %s44
      %s102 = ssub.s32 %s26, %s40
      %s103 = sor.u32 %s101, %s102
      %p104 = scmp.eq.s32.totalorder %s103, 0
      %s106 = sadd.s32 %s105, 1
      %s107 = scalar_select %p104, %s105, %s106
      %p110 = pneg %p104
      %p111 = scmp.eq.s32.totalorder %s18, 1
      %p112 = por %p110, %p111
      %p113 = scmp.ne.s32.totalorder %s105, %s108
      %p114 = scmp.eq.s32.totalorder %s18, 0
      %p115 = por %p113, %p114
      %p116 = scmp.ne.s32.totalorder %s105, %s108
      %p117 = scmp.eq.s32.totalorder %s23, 1
      %p118 = por %p116, %p117
      %p119 = scmp.ne.s32.totalorder %s108, %s109
      %p120 = scmp.eq.s32.totalorder %s23, 0
      %p121 = por %p119, %p120
      %p122 = scmp.ne.s32.totalorder %s108, %s109
      %p123 = scmp.eq.s32.totalorder %s24, 1
      %p124 = por %p122, %p123
      %p126 = scmp.ne.s32.totalorder %s109, %s125
      %p127 = scmp.eq.s32.totalorder %s24, 0
      %p128 = por %p126, %p127
      %s129 = ssub.s32 %s25, %s44
      %s130 = ssub.s32 %s27, %s36
      %s131 = sor.u32 %s129, %s130
      %p132 = scmp.eq.s32.totalorder %s131, 0
      %s134 = sadd.s32 %s133, 1
      %s135 = scalar_select %p132, %s133, %s134
      %p138 = pneg %p132
      %p139 = scmp.eq.s32.totalorder %s18, 1
      %p140 = por %p138, %p139
      %p141 = scmp.ne.s32.totalorder %s133, %s136
      %p142 = scmp.eq.s32.totalorder %s18, 0
      %p143 = por %p141, %p142
      %p144 = scmp.ne.s32.totalorder %s133, %s136
      %p145 = scmp.eq.s32.totalorder %s23, 1
      %p146 = por %p144, %p145
      %p147 = scmp.ne.s32.totalorder %s136, %s137
      %p148 = scmp.eq.s32.totalorder %s23, 0
      %p149 = por %p147, %p148
      %p150 = scmp.ne.s32.totalorder %s136, %s137
      %p151 = scmp.eq.s32.totalorder %s24, 1
      %p152 = por %p150, %p151
      %p154 = scmp.ne.s32.totalorder %s137, %s153
      %p155 = scmp.eq.s32.totalorder %s24, 0
      %p156 = por %p154, %p155
      %s157 = ssub.s32 %s25, %s44
      %s158 = ssub.s32 %s26, %s40
      %s159 = sor.u32 %s157, %s158
      %p160 = scmp.eq.s32.totalorder %s159, 0
      %s162 = sadd.s32 %s161, 1
      %s163 = scalar_select %p160, %s161, %s162
      %p166 = pneg %p160
      %p167 = scmp.eq.s32.totalorder %s18, 1
      %p168 = por %p166, %p167
      %p169 = scmp.ne.s32.totalorder %s161, %s164
      %p170 = scmp.eq.s32.totalorder %s18, 0
      %p171 = por %p169, %p170
      %p172 = scmp.ne.s32.totalorder %s161, %s164
      %p173 = scmp.eq.s32.totalorder %s23, 1
      %p174 = por %p172, %p173
      %p175 = scmp.ne.s32.totalorder %s164, %s165
      %p176 = scmp.eq.s32.totalorder %s23, 0
      %p177 = por %p175, %p176
      %p178 = scmp.ne.s32.totalorder %s164, %s165
      %p179 = scmp.eq.s32.totalorder %s24, 1
      %p180 = por %p178, %p179
      %p182 = scmp.ne.s32.totalorder %s165, %s181
      %p183 = scmp.eq.s32.totalorder %s24, 0
      %p184 = por %p182, %p183
      %s185 = sadd.s32 %s26, %s27
      %s186 = sadd.s32 %s40, %s36
      %s187 = ssub.s32 %s25, %s44
      %s188 = ssub.s32 %s185, %s186
      %s189 = sor.u32 %s187, %s188
      %p190 = scmp.eq.s32.totalorder %s189, 0
      %s192 = sadd.s32 %s191, 1
      %s193 = scalar_select %p190, %s191, %s192
      %p196 = pneg %p190
      %p197 = scmp.eq.s32.totalorder %s18, 1
      %p198 = por %p196, %p197
      %p199 = scmp.ne.s32.totalorder %s191, %s194
      %p200 = scmp.eq.s32.totalorder %s18, 0
      %p201 = por %p199, %p200
      %p202 = scmp.ne.s32.totalorder %s191, %s194
      %p203 = scmp.eq.s32.totalorder %s23, 1
      %p204 = por %p202, %p203
      %p205 = scmp.ne.s32.totalorder %s194, %s195
      %p206 = scmp.eq.s32.totalorder %s23, 0
      %p207 = por %p205, %p206
      %p208 = scmp.ne.s32.totalorder %s194, %s195
      %p209 = scmp.eq.s32.totalorder %s24, 1
      %p210 = por %p208, %p209
      %p212 = scmp.ne.s32.totalorder %s195, %s211
      %p213 = scmp.eq.s32.totalorder %s24, 0
      %p214 = por %p212, %p213
      %p215 = scmp.le.s32.totalorder 1, %s18
      %p216 = scmp.lt.s32.totalorder %s18, 3
      %p217 = pnand %p215, %p216
      %p218 = pneg %p217
      // Predicated region
      $region9: #{tpu_custom_call.1} parent=5 // pred_check
        _
      $region10: #{tpu_custom_call.1} parent=5 // pred_check_branch
        %220 = sbr.rel (%p217) target = $region12
      $region11: #{tpu_custom_call.1} parent=5 // pred_region
        %s221 = ssub.s32 %s18, 1
      $region12: #{tpu_custom_call.1} parent=5 // pred_fallthru
        _
      %p222 = scmp.lt.s32.totalorder %s18, 2
      // Predicated region
      $region13: #{tpu_custom_call.1} parent=5 // pred_check
        %p223 = pneg %p222
      $region14: #{tpu_custom_call.1} parent=5 // pred_check_branch
        %225 = sbr.rel (%p223) target = $region16
      $region15: #{tpu_custom_call.1} parent=5 // pred_region
        // Predicated region
        $region17: #{tpu_custom_call.1} parent=15 // pred_check
          %p226 = pneg %p59
        $region18: #{tpu_custom_call.1} parent=15 // pred_check_branch
          %228 = sbr.rel (%p226) target = $region20
        $region19: #{tpu_custom_call.1} parent=15 // pred_region
          %p229 = scmp.lt.s32.totalorder %s25, 1
          %s230 = scalar_select %p229, %s25, 1
          %p231 = scmp.lt.s32.totalorder %s26, 0
          %s232 = scalar_select %p231, %s26, 0
          %s233 = sadd.s32 %s232, %s230
          %s234 = smul.addr %s233, 4
          %s235 = scalar_lea.vmem %s0, %s234
        $region20: #{tpu_custom_call.1} parent=15 // pred_fallthru
          _
        // Predicated region
        $region21: #{tpu_custom_call.1} parent=15 // pred_check
          %p236 = pneg %p87
        $region22: #{tpu_custom_call.1} parent=15 // pred_check_branch
          %238 = sbr.rel (%p236) target = $region24
        $region23: #{tpu_custom_call.1} parent=15 // pred_region
          %p239 = scmp.lt.s32.totalorder %s25, 1
          %s240 = scalar_select %p239, %s25, 1
          %p241 = scmp.lt.s32.totalorder %s27, 0
          %s242 = scalar_select %p241, %s27, 0
          %s243 = sadd.s32 %s242, %s240
          %s244 = smul.addr %s243, 4
          %s245 = scalar_lea.vmem %s1, %s244
        $region24: #{tpu_custom_call.1} parent=15 // pred_fallthru
          _
        // Predicated region
        $region25: #{tpu_custom_call.1} parent=15 // pred_check
          %p246 = pneg %p115
        $region26: #{tpu_custom_call.1} parent=15 // pred_check_branch
          %248 = sbr.rel (%p246) target = $region28
        $region27: #{tpu_custom_call.1} parent=15 // pred_region
          %s249 = smul.u32 16, %s26
          %p250 = scmp.lt.s32.totalorder %s25, 1
          %s251 = scalar_select %p250, %s25, 1
          %p252 = scmp.lt.s32.totalorder %s249, 15
          %s253 = scalar_select %p252, %s249, 15
          %s254 = smul.addr %s251, 16
          %s255 = sadd.s32 %s253, %s254
          %s256 = smul.addr %s255, 8
          %s257 = scalar_lea.vmem %s2, %s256
          %s258 = smul.u32 16, %s26
        $region28: #{tpu_custom_call.1} parent=15 // pred_fallthru
          _
        // Predicated region
        $region29: #{tpu_custom_call.1} parent=15 // pred_check
          %p259 = pneg %p143
        $region30: #{tpu_custom_call.1} parent=15 // pred_check_branch
          %261 = sbr.rel (%p259) target = $region32
        $region31: #{tpu_custom_call.1} parent=15 // pred_region
          %p262 = scmp.lt.s32.totalorder %s25, 1
          %s263 = scalar_select %p262, %s25, 1
          %p264 = scmp.lt.s32.totalorder %s27, 0
          %s265 = scalar_select %p264, %s27, 0
          %s266 = sadd.s32 %s265, %s263
          %s267 = scalar_lea.vmem %s3, %s266
        $region32: #{tpu_custom_call.1} parent=15 // pred_fallthru
          _
      $region16: #{tpu_custom_call.1} parent=5 // pred_fallthru
        _
      %p268 = scmp.le.s32.totalorder 1, %s18
      %p269 = scmp.lt.s32.totalorder %s18, 3
      %p270 = pnand %p268, %p269
      %p271 = pneg %p270
      // Predicated region
      $region33: #{tpu_custom_call.1} parent=5 // pred_check
        _
      $region34: #{tpu_custom_call.1} parent=5 // pred_check_branch
        %273 = sbr.rel (%p270) target = $region36
      $region35: #{tpu_custom_call.1} parent=5 // pred_region
        %s274 = ssub.s32 %s18, 1
        %p275 = scmp.lt.s32.totalorder %s28, 1
        %s276 = scalar_select %p275, %s28, 1
        %p277 = scmp.lt.s32.totalorder %s29, 0
        %s278 = scalar_select %p277, %s29, 0
        %s279 = sadd.s32 %s278, %s276
        %s280 = smul.addr %s279, 4
        %s281 = scalar_lea.vmem %s0, %s280
        %p282 = pneg %p65
        %p283 = pneg %p62
        %p284 = scmp.lt.s32.totalorder %s28, 1
        %s285 = scalar_select %p284, %s28, 1
        %p286 = scmp.lt.s32.totalorder %s30, 0
        %s287 = scalar_select %p286, %s30, 0
        %s288 = sadd.s32 %s287, %s285
        %s289 = smul.addr %s288, 4
        %s290 = scalar_lea.vmem %s1, %s289
        %p291 = pneg %p93
        %p292 = pneg %p90
        %s293 = smul.u32 16, %s29
        %p294 = scmp.lt.s32.totalorder %s28, 1
        %s295 = scalar_select %p294, %s28, 1
        %p296 = scmp.lt.s32.totalorder %s293, 15
        %s297 = scalar_select %p296, %s293, 15
        %s298 = smul.addr %s295, 16
        %s299 = sadd.s32 %s297, %s298
        %s300 = smul.addr %s299, 8
        %s301 = scalar_lea.vmem %s2, %s300
        %p302 = pneg %p121
        %p303 = pneg %p118
        %p304 = scmp.lt.s32.totalorder %s28, 1
        %s305 = scalar_select %p304, %s28, 1
        %p306 = scmp.lt.s32.totalorder %s30, 0
        %s307 = scalar_select %p306, %s30, 0
        %s308 = sadd.s32 %s307, %s305
        %s309 = scalar_lea.vmem %s3, %s308
        %p310 = pneg %p149
        %p311 = pneg %p146
        %p312 = pneg %p177
        %p313 = pneg %p174
        %s314 = sand.u32 %s164, 1
        %s315 = scalar_lea.sflag [#allocation4], %s314
        %s316 = sand.u32 %s164, 1
        %s317 = scalar_lea.vmem [#allocation3], %s316
        %p318 = pneg %p207
        %p319 = pneg %p204
        %s320 = sand.u32 %s194, 1
        %s321 = scalar_lea.sflag [#allocation6], %s320
        %s322 = sand.u32 %s194, 1
        %s323 = scalar_lea.vmem [#allocation5], %s322
        %p324 = scmp.lt.s32.totalorder %s28, 1
        %s325 = scalar_select %p324, %s28, 1
        %p326 = scmp.lt.s32.totalorder %s29, 0
        %s327 = scalar_select %p326, %s29, 0
        %s328 = sadd.s32 %s327, %s325
        %s329 = smul.addr %s328, 4
        %s330 = scalar_lea.vmem %s0, %s329
        %p331 = scmp.lt.s32.totalorder %s28, 1
        %s332 = scalar_select %p331, %s28, 1
        %p333 = scmp.lt.s32.totalorder %s30, 0
        %s334 = scalar_select %p333, %s30, 0
        %s335 = sadd.s32 %s334, %s332
        %s336 = smul.addr %s335, 4
        %s337 = scalar_lea.vmem %s1, %s336
        %s338 = smul.u32 16, %s29
        %p339 = scmp.lt.s32.totalorder %s28, 1
        %s340 = scalar_select %p339, %s28, 1
        %p341 = scmp.lt.s32.totalorder %s338, 15
        %s342 = scalar_select %p341, %s338, 15
        %s343 = smul.addr %s340, 16
        %s344 = sadd.s32 %s342, %s343
        %s345 = smul.addr %s344, 8
        %s346 = scalar_lea.vmem %s2, %s345
        %s347 = smul.u32 16, %s29
        %p348 = scmp.lt.s32.totalorder %s28, 1
        %s349 = scalar_select %p348, %s28, 1
        %p350 = scmp.lt.s32.totalorder %s30, 0
        %s351 = scalar_select %p350, %s30, 0
        %s352 = sadd.s32 %s351, %s349
        %s353 = scalar_lea.vmem %s3, %s352
        %s354 = sadd.s32 %s29, %s30
        %p355 = scmp.eq.s32.totalorder %s30, 0
        // Predicated region
        $region37: #{tpu_custom_call.1} parent=35 // pred_check
          %p356 = pneg %p355
        $region38: #{tpu_custom_call.1} parent=35 // pred_check_branch
          %358 = sbr.rel (%p356) target = $region40
        $region39: #{tpu_custom_call.1} parent=35 // pred_region
          %359 = vst [vmem:[#allocation2] sm:$0xff] 1e+30
          %360 = vst [vmem:[#allocation2 + $0x8] sm:$0xff] 1e+30
          %361 = vst [vmem:[#allocation2 + $0x10] sm:$0xff] 1e+30
          %362 = vst [vmem:[#allocation2 + $0x18] sm:$0xff] 1e+30
          %363 = vst [vmem:[#allocation2 + $0x20] sm:$0xff] 1e+30
          %364 = vst [vmem:[#allocation2 + $0x28] sm:$0xff] 1e+30
          %365 = vst [vmem:[#allocation2 + $0x30] sm:$0xff] 1e+30
          %366 = vst [vmem:[#allocation2 + $0x38] sm:$0xff] 1e+30
          %367 = vst [vmem:[#allocation2 + $0x40] sm:$0xff] 1e+30
          %368 = vst [vmem:[#allocation2 + $0x48] sm:$0xff] 1e+30
          %369 = vst [vmem:[#allocation2 + $0x50] sm:$0xff] 1e+30
          %370 = vst [vmem:[#allocation2 + $0x58] sm:$0xff] 1e+30
          %371 = vst [vmem:[#allocation2 + $0x60] sm:$0xff] 1e+30
          %372 = vst [vmem:[#allocation2 + $0x68] sm:$0xff] 1e+30
          %373 = vst [vmem:[#allocation2 + $0x70] sm:$0xff] 1e+30
          %374 = vst [vmem:[#allocation2 + $0x78] sm:$0xff] 1e+30
        $region40: #{tpu_custom_call.1} parent=35 // pred_fallthru
          _
        %v375 = vld [vmem:[%s330] sm:$0x7]
        %v376 = vld [vmem:[%s337] sm:$0x7]
        %377 = vxpose.xlu0.b32.start [1/16] %v375, 128
        %378 = vxpose.xlu0.b32.cont [2/16] 0.0, 128
        %379 = vxpose.xlu0.b32.cont [3/16] 0.0, 128
        %380 = vxpose.xlu0.b32.cont [4/16] 0.0, 128
        %381 = vxpose.xlu0.b32.cont [5/16] 0.0, 128
        %382 = vxpose.xlu0.b32.cont [6/16] 0.0, 128
        %383 = vxpose.xlu0.b32.cont [7/16] 0.0, 128
        %384 = vxpose.xlu0.b32.cont [8/16] 0.0, 128
        %385 = vxpose.xlu0.b32.cont [9/16] 0.0, 128
        %386 = vxpose.xlu0.b32.cont [10/16] 0.0, 128
        %387 = vxpose.xlu0.b32.cont [11/16] 0.0, 128
        %388 = vxpose.xlu0.b32.cont [12/16] 0.0, 128
        %389 = vxpose.xlu0.b32.cont [13/16] 0.0, 128
        %390 = vxpose.xlu0.b32.cont [14/16] 0.0, 128
        %391 = vxpose.xlu0.b32.cont [15/16] 0.0, 128
        %392 = vxpose.xlu0.b32.end [16/16] 0.0, 128
        %v393 = vpop.trf.xlu0
        %v394 = vpop.trf.xlu0
        %v395 = vpop.trf.xlu0
        %v396 = vpop.trf.xlu0
        %v397 = vpop.trf.xlu0
        %v398 = vpop.trf.xlu0
        %v399 = vpop.trf.xlu0
        %v400 = vpop.trf.xlu0
        %v401 = vpop.trf.xlu0
        %v402 = vpop.trf.xlu0
        %v403 = vpop.trf.xlu0
        %v404 = vpop.trf.xlu0
        %v405 = vpop.trf.xlu0
        %v406 = vpop.trf.xlu0
        %v407 = vpop.trf.xlu0
        %v408 = vpop.trf.xlu0
        %vm409 = vcmask 23552
        %v411 = vsel %vm409, %v393, 0
        %v414 = vsel %vm409, %v394, 0
        %v417 = vsel %vm409, %v395, 0
        %v420 = vsel %vm409, %v396, 0
        %v423 = vsel %vm409, %v397, 0
        %v426 = vsel %vm409, %v398, 0
        %v429 = vsel %vm409, %v399, 0
        %v432 = vsel %vm409, %v400, 0
        %v435 = vsel %vm409, %v401, 0
        %v438 = vsel %vm409, %v402, 0
        %v441 = vsel %vm409, %v403, 0
        %v444 = vsel %vm409, %v404, 0
        %v447 = vsel %vm409, %v405, 0
        %v450 = vsel %vm409, %v406, 0
        %v453 = vsel %vm409, %v407, 0
        %v456 = vsel %vm409, %v408, 0
        %vm458 = vcmask 1042432
        %v460 = vsel %vm458, %v376, 0
        %462 = vmatpush.msra.mxu0 0.0
        %463 = vmatpush.msra.mxu0 0.0
        %464 = vmatpush.msra.mxu0 0.0
        %465 = vmatpush.msra.mxu0 0.0
        %466 = vmatpush.msra.mxu0 0.0
        %467 = vmatpush.msra.mxu0 0.0
        %468 = vmatpush.msra.mxu0 0.0
        %469 = vmatpush.msra.mxu0 0.0
        %470 = vmatpush.msra.mxu0 0.0
        %471 = vmatpush.msra.mxu0 0.0
        %472 = vmatpush.msra.mxu0 0.0
        %473 = vmatpush.msra.mxu0 0.0
        %474 = vmatpush.msra.mxu0 0.0
        %475 = vmatpush.msra.mxu0 0.0
        %476 = vmatpush.msra.mxu0 0.0
        %v477 = vand.u32 %v460, 4294901760
        %478 = vmatpush.msra.mxu0 %v477
        %v479 = vand.u32 %v411, 4294901760
        %v480 = vsub.f32 %v411, %v479
        %v481 = vand.u32 %v480, 4294901760
        %v482 = vsub.f32 %v480, %v481
        %v483 = vand.u32 %v482, 4294901760
        %484 = vmatmul.f32.gmra.mxu0 %v483
        %v485 = vpop.f32.mrf.mxu0
        %v486 = vadd.f32 0.0, %v485
        %v487 = vand.u32 %v414, 4294901760
        %v488 = vsub.f32 %v414, %v487
        %v489 = vand.u32 %v488, 4294901760
        %v490 = vsub.f32 %v488, %v489
        %v491 = vand.u32 %v490, 4294901760
        %492 = vmatmul.f32.gmra.mxu0 %v491
        %v493 = vpop.f32.mrf.mxu0
        %v494 = vadd.f32 0.0, %v493
        %v495 = vand.u32 %v417, 4294901760
        %v496 = vsub.f32 %v417, %v495
        %v497 = vand.u32 %v496, 4294901760
        %v498 = vsub.f32 %v496, %v497
        %v499 = vand.u32 %v498, 4294901760
        %500 = vmatmul.f32.gmra.mxu0 %v499
        %v501 = vpop.f32.mrf.mxu0
        %v502 = vadd.f32 0.0, %v501
        %v503 = vand.u32 %v420, 4294901760
        %v504 = vsub.f32 %v420, %v503
        %v505 = vand.u32 %v504, 4294901760
        %v506 = vsub.f32 %v504, %v505
        %v507 = vand.u32 %v506, 4294901760
        %508 = vmatmul.f32.gmra.mxu0 %v507
        %v509 = vpop.f32.mrf.mxu0
        %v510 = vadd.f32 0.0, %v509
        %v511 = vand.u32 %v423, 4294901760
        %v512 = vsub.f32 %v423, %v511
        %v513 = vand.u32 %v512, 4294901760
        %v514 = vsub.f32 %v512, %v513
        %v515 = vand.u32 %v514, 4294901760
        %516 = vmatmul.f32.gmra.mxu0 %v515
        %v517 = vpop.f32.mrf.mxu0
        %v518 = vadd.f32 0.0, %v517
        %v519 = vand.u32 %v426, 4294901760
        %v520 = vsub.f32 %v426, %v519
        %v521 = vand.u32 %v520, 4294901760
        %v522 = vsub.f32 %v520, %v521
        %v523 = vand.u32 %v522, 4294901760
        %524 = vmatmul.f32.gmra.mxu0 %v523
        %v525 = vpop.f32.mrf.mxu0
        %v526 = vadd.f32 0.0, %v525
        %v527 = vand.u32 %v429, 4294901760
        %v528 = vsub.f32 %v429, %v527
        %v529 = vand.u32 %v528, 4294901760
        %v530 = vsub.f32 %v528, %v529
        %v531 = vand.u32 %v530, 4294901760
        %532 = vmatmul.f32.gmra.mxu0 %v531
        %v533 = vpop.f32.mrf.mxu0
        %v534 = vadd.f32 0.0, %v533
        %v535 = vand.u32 %v432, 4294901760
        %v536 = vsub.f32 %v432, %v535
        %v537 = vand.u32 %v536, 4294901760
        %v538 = vsub.f32 %v536, %v537
        %v539 = vand.u32 %v538, 4294901760
        %540 = vmatmul.f32.gmra.mxu0 %v539
        %v541 = vpop.f32.mrf.mxu0
        %v542 = vadd.f32 0.0, %v541
        %v543 = vand.u32 %v435, 4294901760
        %v544 = vsub.f32 %v435, %v543
        %v545 = vand.u32 %v544, 4294901760
        %v546 = vsub.f32 %v544, %v545
        %v547 = vand.u32 %v546, 4294901760
        %548 = vmatmul.f32.gmra.mxu0 %v547
        %v549 = vpop.f32.mrf.mxu0
        %v550 = vadd.f32 0.0, %v549
        %v551 = vand.u32 %v438, 4294901760
        %v552 = vsub.f32 %v438, %v551
        %v553 = vand.u32 %v552, 4294901760
        %v554 = vsub.f32 %v552, %v553
        %v555 = vand.u32 %v554, 4294901760
        %556 = vmatmul.f32.gmra.mxu0 %v555
        %v557 = vpop.f32.mrf.mxu0
        %v558 = vadd.f32 0.0, %v557
        %v559 = vand.u32 %v441, 4294901760
        %v560 = vsub.f32 %v441, %v559
        %v561 = vand.u32 %v560, 4294901760
        %v562 = vsub.f32 %v560, %v561
        %v563 = vand.u32 %v562, 4294901760
        %564 = vmatmul.f32.gmra.mxu0 %v563
        %v565 = vpop.f32.mrf.mxu0
        %v566 = vadd.f32 0.0, %v565
        %v567 = vand.u32 %v444, 4294901760
        %v568 = vsub.f32 %v444, %v567
        %v569 = vand.u32 %v568, 4294901760
        %v570 = vsub.f32 %v568, %v569
        %v571 = vand.u32 %v570, 4294901760
        %572 = vmatmul.f32.gmra.mxu0 %v571
        %v573 = vpop.f32.mrf.mxu0
        %v574 = vadd.f32 0.0, %v573
        %v575 = vand.u32 %v447, 4294901760
        %v576 = vsub.f32 %v447, %v575
        %v577 = vand.u32 %v576, 4294901760
        %v578 = vsub.f32 %v576, %v577
        %v579 = vand.u32 %v578, 4294901760
        %580 = vmatmul.f32.gmra.mxu0 %v579
        %v581 = vpop.f32.mrf.mxu0
        %v582 = vadd.f32 0.0, %v581
        %v583 = vand.u32 %v450, 4294901760
        %v584 = vsub.f32 %v450, %v583
        %v585 = vand.u32 %v584, 4294901760
        %v586 = vsub.f32 %v584, %v585
        %v587 = vand.u32 %v586, 4294901760
        %588 = vmatmul.f32.gmra.mxu0 %v587
        %v589 = vpop.f32.mrf.mxu0
        %v590 = vadd.f32 0.0, %v589
        %v591 = vand.u32 %v453, 4294901760
        %v592 = vsub.f32 %v453, %v591
        %v593 = vand.u32 %v592, 4294901760
        %v594 = vsub.f32 %v592, %v593
        %v595 = vand.u32 %v594, 4294901760
        %596 = vmatmul.f32.gmra.mxu0 %v595
        %v597 = vpop.f32.mrf.mxu0
        %v598 = vadd.f32 0.0, %v597
        %v599 = vand.u32 %v456, 4294901760
        %v600 = vsub.f32 %v456, %v599
        %v601 = vand.u32 %v600, 4294901760
        %v602 = vsub.f32 %v600, %v601
        %v603 = vand.u32 %v602, 4294901760
        %604 = vmatmul.f32.gmra.mxu0 %v603
        %v605 = vpop.f32.mrf.mxu0
        %v606 = vadd.f32 0.0, %v605
        %607 = vdwg.mxu0
        %608 = vmatpush.msra.mxu0 0.0
        %609 = vmatpush.msra.mxu0 0.0
        %610 = vmatpush.msra.mxu0 0.0
        %611 = vmatpush.msra.mxu0 0.0
        %612 = vmatpush.msra.mxu0 0.0
        %613 = vmatpush.msra.mxu0 0.0
        %614 = vmatpush.msra.mxu0 0.0
        %615 = vmatpush.msra.mxu0 0.0
        %616 = vmatpush.msra.mxu0 0.0
        %617 = vmatpush.msra.mxu0 0.0
        %618 = vmatpush.msra.mxu0 0.0
        %619 = vmatpush.msra.mxu0 0.0
        %620 = vmatpush.msra.mxu0 0.0
        %621 = vmatpush.msra.mxu0 0.0
        %622 = vmatpush.msra.mxu0 0.0
        %v623 = vand.u32 %v460, 4294901760
        %v624 = vsub.f32 %v460, %v623
        %v625 = vand.u32 %v624, 4294901760
        %v626 = vsub.f32 %v624, %v625
        %v627 = vand.u32 %v626, 4294901760
        %628 = vmatpush.msra.mxu0 %v627
        %v629 = vand.u32 %v411, 4294901760
        %630 = vmatmul.f32.gmra.mxu0 %v629
        %v631 = vpop.f32.mrf.mxu0
        %v632 = vadd.f32 %v486, %v631
        %v633 = vand.u32 %v414, 4294901760
        %634 = vmatmul.f32.gmra.mxu0 %v633
        %v635 = vpop.f32.mrf.mxu0
        %v636 = vadd.f32 %v494, %v635
        %v637 = vand.u32 %v417, 4294901760
        %638 = vmatmul.f32.gmra.mxu0 %v637
        %v639 = vpop.f32.mrf.mxu0
        %v640 = vadd.f32 %v502, %v639
        %v641 = vand.u32 %v420, 4294901760
        %642 = vmatmul.f32.gmra.mxu0 %v641
        %v643 = vpop.f32.mrf.mxu0
        %v644 = vadd.f32 %v510, %v643
        %v645 = vand.u32 %v423, 4294901760
        %646 = vmatmul.f32.gmra.mxu0 %v645
        %v647 = vpop.f32.mrf.mxu0
        %v648 = vadd.f32 %v518, %v647
        %v649 = vand.u32 %v426, 4294901760
        %650 = vmatmul.f32.gmra.mxu0 %v649
        %v651 = vpop.f32.mrf.mxu0
        %v652 = vadd.f32 %v526, %v651
        %v653 = vand.u32 %v429, 4294901760
        %654 = vmatmul.f32.gmra.mxu0 %v653
        %v655 = vpop.f32.mrf.mxu0
        %v656 = vadd.f32 %v534, %v655
        %v657 = vand.u32 %v432, 4294901760
        %658 = vmatmul.f32.gmra.mxu0 %v657
        %v659 = vpop.f32.mrf.mxu0
        %v660 = vadd.f32 %v542, %v659
        %v661 = vand.u32 %v435, 4294901760
        %662 = vmatmul.f32.gmra.mxu0 %v661
        %v663 = vpop.f32.mrf.mxu0
        %v664 = vadd.f32 %v550, %v663
        %v665 = vand.u32 %v438, 4294901760
        %666 = vmatmul.f32.gmra.mxu0 %v665
        %v667 = vpop.f32.mrf.mxu0
        %v668 = vadd.f32 %v558, %v667
        %v669 = vand.u32 %v441, 4294901760
        %670 = vmatmul.f32.gmra.mxu0 %v669
        %v671 = vpop.f32.mrf.mxu0
        %v672 = vadd.f32 %v566, %v671
        %v673 = vand.u32 %v444, 4294901760
        %674 = vmatmul.f32.gmra.mxu0 %v673
        %v675 = vpop.f32.mrf.mxu0
        %v676 = vadd.f32 %v574, %v675
        %v677 = vand.u32 %v447, 4294901760
        %678 = vmatmul.f32.gmra.mxu0 %v677
        %v679 = vpop.f32.mrf.mxu0
        %v680 = vadd.f32 %v582, %v679
        %v681 = vand.u32 %v450, 4294901760
        %682 = vmatmul.f32.gmra.mxu0 %v681
        %v683 = vpop.f32.mrf.mxu0
        %v684 = vadd.f32 %v590, %v683
        %v685 = vand.u32 %v453, 4294901760
        %686 = vmatmul.f32.gmra.mxu0 %v685
        %v687 = vpop.f32.mrf.mxu0
        %v688 = vadd.f32 %v598, %v687
        %v689 = vand.u32 %v456, 4294901760
        %690 = vmatmul.f32.gmra.mxu0 %v689
        %v691 = vpop.f32.mrf.mxu0
        %v692 = vadd.f32 %v606, %v691
        %693 = vdwg.mxu0
        %694 = vmatpush.msra.mxu0 0.0
        %695 = vmatpush.msra.mxu0 0.0
        %696 = vmatpush.msra.mxu0 0.0
        %697 = vmatpush.msra.mxu0 0.0
        %698 = vmatpush.msra.mxu0 0.0
        %699 = vmatpush.msra.mxu0 0.0
        %700 = vmatpush.msra.mxu0 0.0
        %701 = vmatpush.msra.mxu0 0.0
        %702 = vmatpush.msra.mxu0 0.0
        %703 = vmatpush.msra.mxu0 0.0
        %704 = vmatpush.msra.mxu0 0.0
        %705 = vmatpush.msra.mxu0 0.0
        %706 = vmatpush.msra.mxu0 0.0
        %707 = vmatpush.msra.mxu0 0.0
        %708 = vmatpush.msra.mxu0 0.0
        %v709 = vand.u32 %v460, 4294901760
        %v710 = vsub.f32 %v460, %v709
        %711 = vmatpush.msra.mxu0 %v710
        %v712 = vand.u32 %v411, 4294901760
        %v713 = vsub.f32 %v411, %v712
        %714 = vmatmul.f32.gmra.mxu0 %v713
        %v715 = vpop.f32.mrf.mxu0
        %v716 = vadd.f32 %v632, %v715
        %v717 = vand.u32 %v414, 4294901760
        %v718 = vsub.f32 %v414, %v717
        %719 = vmatmul.f32.gmra.mxu0 %v718
        %v720 = vpop.f32.mrf.mxu0
        %v721 = vadd.f32 %v636, %v720
        %v722 = vand.u32 %v417, 4294901760
        %v723 = vsub.f32 %v417, %v722
        %724 = vmatmul.f32.gmra.mxu0 %v723
        %v725 = vpop.f32.mrf.mxu0
        %v726 = vadd.f32 %v640, %v725
        %v727 = vand.u32 %v420, 4294901760
        %v728 = vsub.f32 %v420, %v727
        %729 = vmatmul.f32.gmra.mxu0 %v728
        %v730 = vpop.f32.mrf.mxu0
        %v731 = vadd.f32 %v644, %v730
        %v732 = vand.u32 %v423, 4294901760
        %v733 = vsub.f32 %v423, %v732
        %734 = vmatmul.f32.gmra.mxu0 %v733
        %v735 = vpop.f32.mrf.mxu0
        %v736 = vadd.f32 %v648, %v735
        %v737 = vand.u32 %v426, 4294901760
        %v738 = vsub.f32 %v426, %v737
        %739 = vmatmul.f32.gmra.mxu0 %v738
        %v740 = vpop.f32.mrf.mxu0
        %v741 = vadd.f32 %v652, %v740
        %v742 = vand.u32 %v429, 4294901760
        %v743 = vsub.f32 %v429, %v742
        %744 = vmatmul.f32.gmra.mxu0 %v743
        %v745 = vpop.f32.mrf.mxu0
        %v746 = vadd.f32 %v656, %v745
        %v747 = vand.u32 %v432, 4294901760
        %v748 = vsub.f32 %v432, %v747
        %749 = vmatmul.f32.gmra.mxu0 %v748
        %v750 = vpop.f32.mrf.mxu0
        %v751 = vadd.f32 %v660, %v750
        %v752 = vand.u32 %v435, 4294901760
        %v753 = vsub.f32 %v435, %v752
        %754 = vmatmul.f32.gmra.mxu0 %v753
        %v755 = vpop.f32.mrf.mxu0
        %v756 = vadd.f32 %v664, %v755
        %v757 = vand.u32 %v438, 4294901760
        %v758 = vsub.f32 %v438, %v757
        %759 = vmatmul.f32.gmra.mxu0 %v758
        %v760 = vpop.f32.mrf.mxu0
        %v761 = vadd.f32 %v668, %v760
        %v762 = vand.u32 %v441, 4294901760
        %v763 = vsub.f32 %v441, %v762
        %764 = vmatmul.f32.gmra.mxu0 %v763
        %v765 = vpop.f32.mrf.mxu0
        %v766 = vadd.f32 %v672, %v765
        %v767 = vand.u32 %v444, 4294901760
        %v768 = vsub.f32 %v444, %v767
        %769 = vmatmul.f32.gmra.mxu0 %v768
        %v770 = vpop.f32.mrf.mxu0
        %v771 = vadd.f32 %v676, %v770
        %v772 = vand.u32 %v447, 4294901760
        %v773 = vsub.f32 %v447, %v772
        %774 = vmatmul.f32.gmra.mxu0 %v773
        %v775 = vpop.f32.mrf.mxu0
        %v776 = vadd.f32 %v680, %v775
        %v777 = vand.u32 %v450, 4294901760
        %v778 = vsub.f32 %v450, %v777
        %779 = vmatmul.f32.gmra.mxu0 %v778
        %v780 = vpop.f32.mrf.mxu0
        %v781 = vadd.f32 %v684, %v780
        %v782 = vand.u32 %v453, 4294901760
        %v783 = vsub.f32 %v453, %v782
        %784 = vmatmul.f32.gmra.mxu0 %v783
        %v785 = vpop.f32.mrf.mxu0
        %v786 = vadd.f32 %v688, %v785
        %v787 = vand.u32 %v456, 4294901760
        %v788 = vsub.f32 %v456, %v787
        %789 = vmatmul.f32.gmra.mxu0 %v788
        %v790 = vpop.f32.mrf.mxu0
        %v791 = vadd.f32 %v692, %v790
        %792 = vdwg.mxu0
        %793 = vmatpush.msra.mxu0 0.0
        %794 = vmatpush.msra.mxu0 0.0
        %795 = vmatpush.msra.mxu0 0.0
        %796 = vmatpush.msra.mxu0 0.0
        %797 = vmatpush.msra.mxu0 0.0
        %798 = vmatpush.msra.mxu0 0.0
        %799 = vmatpush.msra.mxu0 0.0
        %800 = vmatpush.msra.mxu0 0.0
        %801 = vmatpush.msra.mxu0 0.0
        %802 = vmatpush.msra.mxu0 0.0
        %803 = vmatpush.msra.mxu0 0.0
        %804 = vmatpush.msra.mxu0 0.0
        %805 = vmatpush.msra.mxu0 0.0
        %806 = vmatpush.msra.mxu0 0.0
        %807 = vmatpush.msra.mxu0 0.0
        %v808 = vand.u32 %v460, 4294901760
        %809 = vmatpush.msra.mxu0 %v808
        %v810 = vand.u32 %v411, 4294901760
        %v811 = vsub.f32 %v411, %v810
        %v812 = vand.u32 %v811, 4294901760
        %813 = vmatmul.f32.gmra.mxu0 %v812
        %v814 = vpop.f32.mrf.mxu0
        %v815 = vadd.f32 %v716, %v814
        %v816 = vand.u32 %v414, 4294901760
        %v817 = vsub.f32 %v414, %v816
        %v818 = vand.u32 %v817, 4294901760
        %819 = vmatmul.f32.gmra.mxu0 %v818
        %v820 = vpop.f32.mrf.mxu0
        %v821 = vadd.f32 %v721, %v820
        %v822 = vand.u32 %v417, 4294901760
        %v823 = vsub.f32 %v417, %v822
        %v824 = vand.u32 %v823, 4294901760
        %825 = vmatmul.f32.gmra.mxu0 %v824
        %v826 = vpop.f32.mrf.mxu0
        %v827 = vadd.f32 %v726, %v826
        %v828 = vand.u32 %v420, 4294901760
        %v829 = vsub.f32 %v420, %v828
        %v830 = vand.u32 %v829, 4294901760
        %831 = vmatmul.f32.gmra.mxu0 %v830
        %v832 = vpop.f32.mrf.mxu0
        %v833 = vadd.f32 %v731, %v832
        %v834 = vand.u32 %v423, 4294901760
        %v835 = vsub.f32 %v423, %v834
        %v836 = vand.u32 %v835, 4294901760
        %837 = vmatmul.f32.gmra.mxu0 %v836
        %v838 = vpop.f32.mrf.mxu0
        %v839 = vadd.f32 %v736, %v838
        %v840 = vand.u32 %v426, 4294901760
        %v841 = vsub.f32 %v426, %v840
        %v842 = vand.u32 %v841, 4294901760
        %843 = vmatmul.f32.gmra.mxu0 %v842
        %v844 = vpop.f32.mrf.mxu0
        %v845 = vadd.f32 %v741, %v844
        %v846 = vand.u32 %v429, 4294901760
        %v847 = vsub.f32 %v429, %v846
        %v848 = vand.u32 %v847, 4294901760
        %849 = vmatmul.f32.gmra.mxu0 %v848
        %v850 = vpop.f32.mrf.mxu0
        %v851 = vadd.f32 %v746, %v850
        %v852 = vand.u32 %v432, 4294901760
        %v853 = vsub.f32 %v432, %v852
        %v854 = vand.u32 %v853, 4294901760
        %855 = vmatmul.f32.gmra.mxu0 %v854
        %v856 = vpop.f32.mrf.mxu0
        %v857 = vadd.f32 %v751, %v856
        %v858 = vand.u32 %v435, 4294901760
        %v859 = vsub.f32 %v435, %v858
        %v860 = vand.u32 %v859, 4294901760
        %861 = vmatmul.f32.gmra.mxu0 %v860
        %v862 = vpop.f32.mrf.mxu0
        %v863 = vadd.f32 %v756, %v862
        %v864 = vand.u32 %v438, 4294901760
        %v865 = vsub.f32 %v438, %v864
        %v866 = vand.u32 %v865, 4294901760
        %867 = vmatmul.f32.gmra.mxu0 %v866
        %v868 = vpop.f32.mrf.mxu0
        %v869 = vadd.f32 %v761, %v868
        %v870 = vand.u32 %v441, 4294901760
        %v871 = vsub.f32 %v441, %v870
        %v872 = vand.u32 %v871, 4294901760
        %873 = vmatmul.f32.gmra.mxu0 %v872
        %v874 = vpop.f32.mrf.mxu0
        %v875 = vadd.f32 %v766, %v874
        %v876 = vand.u32 %v444, 4294901760
        %v877 = vsub.f32 %v444, %v876
        %v878 = vand.u32 %v877, 4294901760
        %879 = vmatmul.f32.gmra.mxu0 %v878
        %v880 = vpop.f32.mrf.mxu0
        %v881 = vadd.f32 %v771, %v880
        %v882 = vand.u32 %v447, 4294901760
        %v883 = vsub.f32 %v447, %v882
        %v884 = vand.u32 %v883, 4294901760
        %885 = vmatmul.f32.gmra.mxu0 %v884
        %v886 = vpop.f32.mrf.mxu0
        %v887 = vadd.f32 %v776, %v886
        %v888 = vand.u32 %v450, 4294901760
        %v889 = vsub.f32 %v450, %v888
        %v890 = vand.u32 %v889, 4294901760
        %891 = vmatmul.f32.gmra.mxu0 %v890
        %v892 = vpop.f32.mrf.mxu0
        %v893 = vadd.f32 %v781, %v892
        %v894 = vand.u32 %v453, 4294901760
        %v895 = vsub.f32 %v453, %v894
        %v896 = vand.u32 %v895, 4294901760
        %897 = vmatmul.f32.gmra.mxu0 %v896
        %v898 = vpop.f32.mrf.mxu0
        %v899 = vadd.f32 %v786, %v898
        %v900 = vand.u32 %v456, 4294901760
        %v901 = vsub.f32 %v456, %v900
        %v902 = vand.u32 %v901, 4294901760
        %903 = vmatmul.f32.gmra.mxu0 %v902
        %v904 = vpop.f32.mrf.mxu0
        %v905 = vadd.f32 %v791, %v904
        %906 = vdwg.mxu0
        %907 = vmatpush.msra.mxu0 0.0
        %908 = vmatpush.msra.mxu0 0.0
        %909 = vmatpush.msra.mxu0 0.0
        %910 = vmatpush.msra.mxu0 0.0
        %911 = vmatpush.msra.mxu0 0.0
        %912 = vmatpush.msra.mxu0 0.0
        %913 = vmatpush.msra.mxu0 0.0
        %914 = vmatpush.msra.mxu0 0.0
        %915 = vmatpush.msra.mxu0 0.0
        %916 = vmatpush.msra.mxu0 0.0
        %917 = vmatpush.msra.mxu0 0.0
        %918 = vmatpush.msra.mxu0 0.0
        %919 = vmatpush.msra.mxu0 0.0
        %920 = vmatpush.msra.mxu0 0.0
        %921 = vmatpush.msra.mxu0 0.0
        %v922 = vand.u32 %v460, 4294901760
        %v923 = vsub.f32 %v460, %v922
        %v924 = vand.u32 %v923, 4294901760
        %925 = vmatpush.msra.mxu0 %v924
        %v926 = vand.u32 %v411, 4294901760
        %927 = vmatmul.f32.gmra.mxu0 %v926
        %v928 = vpop.f32.mrf.mxu0
        %v929 = vadd.f32 %v815, %v928
        %v930 = vand.u32 %v414, 4294901760
        %931 = vmatmul.f32.gmra.mxu0 %v930
        %v932 = vpop.f32.mrf.mxu0
        %v933 = vadd.f32 %v821, %v932
        %v934 = vand.u32 %v417, 4294901760
        %935 = vmatmul.f32.gmra.mxu0 %v934
        %v936 = vpop.f32.mrf.mxu0
        %v937 = vadd.f32 %v827, %v936
        %v938 = vand.u32 %v420, 4294901760
        %939 = vmatmul.f32.gmra.mxu0 %v938
        %v940 = vpop.f32.mrf.mxu0
        %v941 = vadd.f32 %v833, %v940
        %v942 = vand.u32 %v423, 4294901760
        %943 = vmatmul.f32.gmra.mxu0 %v942
        %v944 = vpop.f32.mrf.mxu0
        %v945 = vadd.f32 %v839, %v944
        %v946 = vand.u32 %v426, 4294901760
        %947 = vmatmul.f32.gmra.mxu0 %v946
        %v948 = vpop.f32.mrf.mxu0
        %v949 = vadd.f32 %v845, %v948
        %v950 = vand.u32 %v429, 4294901760
        %951 = vmatmul.f32.gmra.mxu0 %v950
        %v952 = vpop.f32.mrf.mxu0
        %v953 = vadd.f32 %v851, %v952
        %v954 = vand.u32 %v432, 4294901760
        %955 = vmatmul.f32.gmra.mxu0 %v954
        %v956 = vpop.f32.mrf.mxu0
        %v957 = vadd.f32 %v857, %v956
        %v958 = vand.u32 %v435, 4294901760
        %959 = vmatmul.f32.gmra.mxu0 %v958
        %v960 = vpop.f32.mrf.mxu0
        %v961 = vadd.f32 %v863, %v960
        %v962 = vand.u32 %v438, 4294901760
        %963 = vmatmul.f32.gmra.mxu0 %v962
        %v964 = vpop.f32.mrf.mxu0
        %v965 = vadd.f32 %v869, %v964
        %v966 = vand.u32 %v441, 4294901760
        %967 = vmatmul.f32.gmra.mxu0 %v966
        %v968 = vpop.f32.mrf.mxu0
        %v969 = vadd.f32 %v875, %v968
        %v970 = vand.u32 %v444, 4294901760
        %971 = vmatmul.f32.gmra.mxu0 %v970
        %v972 = vpop.f32.mrf.mxu0
        %v973 = vadd.f32 %v881, %v972
        %v974 = vand.u32 %v447, 4294901760
        %975 = vmatmul.f32.gmra.mxu0 %v974
        %v976 = vpop.f32.mrf.mxu0
        %v977 = vadd.f32 %v887, %v976
        %v978 = vand.u32 %v450, 4294901760
        %979 = vmatmul.f32.gmra.mxu0 %v978
        %v980 = vpop.f32.mrf.mxu0
        %v981 = vadd.f32 %v893, %v980
        %v982 = vand.u32 %v453, 4294901760
        %983 = vmatmul.f32.gmra.mxu0 %v982
        %v984 = vpop.f32.mrf.mxu0
        %v985 = vadd.f32 %v899, %v984
        %v986 = vand.u32 %v456, 4294901760
        %987 = vmatmul.f32.gmra.mxu0 %v986
        %v988 = vpop.f32.mrf.mxu0
        %v989 = vadd.f32 %v905, %v988
        %990 = vdwg.mxu0
        %991 = vmatpush.msra.mxu0 0.0
        %992 = vmatpush.msra.mxu0 0.0
        %993 = vmatpush.msra.mxu0 0.0
        %994 = vmatpush.msra.mxu0 0.0
        %995 = vmatpush.msra.mxu0 0.0
        %996 = vmatpush.msra.mxu0 0.0
        %997 = vmatpush.msra.mxu0 0.0
        %998 = vmatpush.msra.mxu0 0.0
        %999 = vmatpush.msra.mxu0 0.0
        %1000 = vmatpush.msra.mxu0 0.0
        %1001 = vmatpush.msra.mxu0 0.0
        %1002 = vmatpush.msra.mxu0 0.0
        %1003 = vmatpush.msra.mxu0 0.0
        %1004 = vmatpush.msra.mxu0 0.0
        %1005 = vmatpush.msra.mxu0 0.0
        %v1006 = vand.u32 %v460, 4294901760
        %1007 = vmatpush.msra.mxu0 %v1006
        %v1008 = vand.u32 %v411, 4294901760
        %1009 = vmatmul.f32.gmra.mxu0 %v1008
        %v1010 = vpop.f32.mrf.mxu0
        %v1011 = vadd.f32 %v929, %v1010
        %v1012 = vand.u32 %v414, 4294901760
        %1013 = vmatmul.f32.gmra.mxu0 %v1012
        %v1014 = vpop.f32.mrf.mxu0
        %v1015 = vadd.f32 %v933, %v1014
        %v1016 = vand.u32 %v417, 4294901760
        %1017 = vmatmul.f32.gmra.mxu0 %v1016
        %v1018 = vpop.f32.mrf.mxu0
        %v1019 = vadd.f32 %v937, %v1018
        %v1020 = vand.u32 %v420, 4294901760
        %1021 = vmatmul.f32.gmra.mxu0 %v1020
        %v1022 = vpop.f32.mrf.mxu0
        %v1023 = vadd.f32 %v941, %v1022
        %v1024 = vand.u32 %v423, 4294901760
        %1025 = vmatmul.f32.gmra.mxu0 %v1024
        %v1026 = vpop.f32.mrf.mxu0
        %v1027 = vadd.f32 %v945, %v1026
        %v1028 = vand.u32 %v426, 4294901760
        %1029 = vmatmul.f32.gmra.mxu0 %v1028
        %v1030 = vpop.f32.mrf.mxu0
        %v1031 = vadd.f32 %v949, %v1030
        %v1032 = vand.u32 %v429, 4294901760
        %1033 = vmatmul.f32.gmra.mxu0 %v1032
        %v1034 = vpop.f32.mrf.mxu0
        %v1035 = vadd.f32 %v953, %v1034
        %v1036 = vand.u32 %v432, 4294901760
        %1037 = vmatmul.f32.gmra.mxu0 %v1036
        %v1038 = vpop.f32.mrf.mxu0
        %v1039 = vadd.f32 %v957, %v1038
        %v1040 = vand.u32 %v435, 4294901760
        %1041 = vmatmul.f32.gmra.mxu0 %v1040
        %v1042 = vpop.f32.mrf.mxu0
        %v1043 = vadd.f32 %v961, %v1042
        %v1044 = vand.u32 %v438, 4294901760
        %1045 = vmatmul.f32.gmra.mxu0 %v1044
        %v1046 = vpop.f32.mrf.mxu0
        %v1047 = vadd.f32 %v965, %v1046
        %v1048 = vand.u32 %v441, 4294901760
        %1049 = vmatmul.f32.gmra.mxu0 %v1048
        %v1050 = vpop.f32.mrf.mxu0
        %v1051 = vadd.f32 %v969, %v1050
        %v1052 = vand.u32 %v444, 4294901760
        %1053 = vmatmul.f32.gmra.mxu0 %v1052
        %v1054 = vpop.f32.mrf.mxu0
        %v1055 = vadd.f32 %v973, %v1054
        %v1056 = vand.u32 %v447, 4294901760
        %1057 = vmatmul.f32.gmra.mxu0 %v1056
        %v1058 = vpop.f32.mrf.mxu0
        %v1059 = vadd.f32 %v977, %v1058
        %v1060 = vand.u32 %v450, 4294901760
        %1061 = vmatmul.f32.gmra.mxu0 %v1060
        %v1062 = vpop.f32.mrf.mxu0
        %v1063 = vadd.f32 %v981, %v1062
        %v1064 = vand.u32 %v453, 4294901760
        %1065 = vmatmul.f32.gmra.mxu0 %v1064
        %v1066 = vpop.f32.mrf.mxu0
        %v1067 = vadd.f32 %v985, %v1066
        %v1068 = vand.u32 %v456, 4294901760
        %1069 = vmatmul.f32.gmra.mxu0 %v1068
        %v1070 = vpop.f32.mrf.mxu0
        %v1071 = vadd.f32 %v989, %v1070
        %1072 = vdwg.mxu0
        %v1073 = vld [vmem:[%s346] sm:$0xff]
        %v1074 = vld [vmem:[%s346 + $0x8] sm:$0xff]
        %v1075 = vld [vmem:[%s346 + $0x10] sm:$0xff]
        %v1076 = vld [vmem:[%s346 + $0x18] sm:$0xff]
        %v1077 = vld [vmem:[%s346 + $0x20] sm:$0xff]
        %v1078 = vld [vmem:[%s346 + $0x28] sm:$0xff]
        %v1079 = vld [vmem:[%s346 + $0x30] sm:$0xff]
        %v1080 = vld [vmem:[%s346 + $0x38] sm:$0xff]
        %v1081 = vld [vmem:[%s346 + $0x40] sm:$0xff]
        %v1082 = vld [vmem:[%s346 + $0x48] sm:$0xff]
        %v1083 = vld [vmem:[%s346 + $0x50] sm:$0xff]
        %v1084 = vld [vmem:[%s346 + $0x58] sm:$0xff]
        %v1085 = vld [vmem:[%s346 + $0x60] sm:$0xff]
        %v1086 = vld [vmem:[%s346 + $0x68] sm:$0xff]
        %v1087 = vld [vmem:[%s346 + $0x70] sm:$0xff]
        %v1088 = vld [vmem:[%s346 + $0x78] sm:$0xff]
        %v1089 = vld [vmem:[%s353] sm:$0x1]
        %v1090 = vld [vmem:[#allocation2] sm:$0xff]
        %v1091 = vld [vmem:[#allocation2 + $0x8] sm:$0xff]
        %v1092 = vld [vmem:[#allocation2 + $0x10] sm:$0xff]
        %v1093 = vld [vmem:[#allocation2 + $0x18] sm:$0xff]
        %v1094 = vld [vmem:[#allocation2 + $0x20] sm:$0xff]
        %v1095 = vld [vmem:[#allocation2 + $0x28] sm:$0xff]
        %v1096 = vld [vmem:[#allocation2 + $0x30] sm:$0xff]
        %v1097 = vld [vmem:[#allocation2 + $0x38] sm:$0xff]
        %v1098 = vld [vmem:[#allocation2 + $0x40] sm:$0xff]
        %v1099 = vld [vmem:[#allocation2 + $0x48] sm:$0xff]
        %v1100 = vld [vmem:[#allocation2 + $0x50] sm:$0xff]
        %v1101 = vld [vmem:[#allocation2 + $0x58] sm:$0xff]
        %v1102 = vld [vmem:[#allocation2 + $0x60] sm:$0xff]
        %v1103 = vld [vmem:[#allocation2 + $0x68] sm:$0xff]
        %v1104 = vld [vmem:[#allocation2 + $0x70] sm:$0xff]
        %v1105 = vld [vmem:[#allocation2 + $0x78] sm:$0xff]
        %1107 = vset.pattern.permute.xlu0 0
        %1108 = vperm.xlu0 %1107, %v1073
        %v1109 = vpop.permute.xlu0 %1108
        %1112 = vset.pattern.permute.xlu0 0
        %1113 = vperm.xlu0 %1112, %v1074
        %v1114 = vpop.permute.xlu0 %1113
        %1117 = vset.pattern.permute.xlu0 0
        %1118 = vperm.xlu0 %1117, %v1075
        %v1119 = vpop.permute.xlu0 %1118
        %1122 = vset.pattern.permute.xlu0 0
        %1123 = vperm.xlu0 %1122, %v1076
        %v1124 = vpop.permute.xlu0 %1123
        %1127 = vset.pattern.permute.xlu0 0
        %1128 = vperm.xlu0 %1127, %v1077
        %v1129 = vpop.permute.xlu0 %1128
        %1132 = vset.pattern.permute.xlu0 0
        %1133 = vperm.xlu0 %1132, %v1078
        %v1134 = vpop.permute.xlu0 %1133
        %1137 = vset.pattern.permute.xlu0 0
        %1138 = vperm.xlu0 %1137, %v1079
        %v1139 = vpop.permute.xlu0 %1138
        %1142 = vset.pattern.permute.xlu0 0
        %1143 = vperm.xlu0 %1142, %v1080
        %v1144 = vpop.permute.xlu0 %1143
        %1147 = vset.pattern.permute.xlu0 0
        %1148 = vperm.xlu0 %1147, %v1081
        %v1149 = vpop.permute.xlu0 %1148
        %1152 = vset.pattern.permute.xlu0 0
        %1153 = vperm.xlu0 %1152, %v1082
        %v1154 = vpop.permute.xlu0 %1153
        %1157 = vset.pattern.permute.xlu0 0
        %1158 = vperm.xlu0 %1157, %v1083
        %v1159 = vpop.permute.xlu0 %1158
        %1162 = vset.pattern.permute.xlu0 0
        %1163 = vperm.xlu0 %1162, %v1084
        %v1164 = vpop.permute.xlu0 %1163
        %1167 = vset.pattern.permute.xlu0 0
        %1168 = vperm.xlu0 %1167, %v1085
        %v1169 = vpop.permute.xlu0 %1168
        %1172 = vset.pattern.permute.xlu0 0
        %1173 = vperm.xlu0 %1172, %v1086
        %v1174 = vpop.permute.xlu0 %1173
        %1177 = vset.pattern.permute.xlu0 0
        %1178 = vperm.xlu0 %1177, %v1087
        %v1179 = vpop.permute.xlu0 %1178
        %1182 = vset.pattern.permute.xlu0 0
        %1183 = vperm.xlu0 %1182, %v1088
        %v1184 = vpop.permute.xlu0 %1183
        %v1187 = vperm.slane %v1089, 0
        %v1189 = vadd.f32 %v1187, %v1011
        %v1190 = vadd.f32 %v1187, %v1015
        %v1191 = vadd.f32 %v1187, %v1019
        %v1192 = vadd.f32 %v1187, %v1023
        %v1193 = vadd.f32 %v1187, %v1027
        %v1194 = vadd.f32 %v1187, %v1031
        %v1195 = vadd.f32 %v1187, %v1035
        %v1196 = vadd.f32 %v1187, %v1039
        %v1197 = vadd.f32 %v1187, %v1043
        %v1198 = vadd.f32 %v1187, %v1047
        %v1199 = vadd.f32 %v1187, %v1051
        %v1200 = vadd.f32 %v1187, %v1055
        %v1201 = vadd.f32 %v1187, %v1059
        %v1202 = vadd.f32 %v1187, %v1063
        %v1203 = vadd.f32 %v1187, %v1067
        %v1204 = vadd.f32 %v1187, %v1071
        %v1205 = vadd.f32 %v1189, %v1109
        %v1206 = vadd.f32 %v1190, %v1114
        %v1207 = vadd.f32 %v1191, %v1119
        %v1208 = vadd.f32 %v1192, %v1124
        %v1209 = vadd.f32 %v1193, %v1129
        %v1210 = vadd.f32 %v1194, %v1134
        %v1211 = vadd.f32 %v1195, %v1139
        %v1212 = vadd.f32 %v1196, %v1144
        %v1213 = vadd.f32 %v1197, %v1149
        %v1214 = vadd.f32 %v1198, %v1154
        %v1215 = vadd.f32 %v1199, %v1159
        %v1216 = vadd.f32 %v1200, %v1164
        %v1217 = vadd.f32 %v1201, %v1169
        %v1218 = vadd.f32 %v1202, %v1174
        %v1219 = vadd.f32 %v1203, %v1179
        %v1220 = vadd.f32 %v1204, %v1184
        %v1221 = vmin.f32 %v1090, %v1205
        %v1222 = vmin.f32 %v1091, %v1206
        %v1223 = vmin.f32 %v1092, %v1207
        %v1224 = vmin.f32 %v1093, %v1208
        %v1225 = vmin.f32 %v1094, %v1209
        %v1226 = vmin.f32 %v1095, %v1210
        %v1227 = vmin.f32 %v1096, %v1211
        %v1228 = vmin.f32 %v1097, %v1212
        %v1229 = vmin.f32 %v1098, %v1213
        %v1230 = vmin.f32 %v1099, %v1214
        %v1231 = vmin.f32 %v1100, %v1215
        %v1232 = vmin.f32 %v1101, %v1216
        %v1233 = vmin.f32 %v1102, %v1217
        %v1234 = vmin.f32 %v1103, %v1218
        %v1235 = vmin.f32 %v1104, %v1219
        %v1236 = vmin.f32 %v1105, %v1220
        %v1237 = vmin.f32 %v1205, %v1209
        %v1238 = vmin.f32 %v1206, %v1210
        %v1239 = vmin.f32 %v1207, %v1211
        %v1240 = vmin.f32 %v1208, %v1212
        %v1241 = vmin.f32 %v1237, %v1213
        %v1242 = vmin.f32 %v1238, %v1214
        %v1243 = vmin.f32 %v1239, %v1215
        %v1244 = vmin.f32 %v1240, %v1216
        %v1245 = vmin.f32 %v1241, %v1217
        %v1246 = vmin.f32 %v1242, %v1218
        %v1247 = vmin.f32 %v1243, %v1219
        %v1248 = vmin.f32 %v1244, %v1220
        %v1249 = vmin.f32 %v1245, %v1246
        %v1250 = vmin.f32 %v1247, %v1248
        %v1251 = vmin.f32 %v1249, %v1250
        %v1252 = vrot.slane %v1251, 4
        %v1253 = vmin.f32 %v1251, %v1252
        %v1254 = vrot.slane %v1253, 2
        %v1255 = vmin.f32 %v1253, %v1254
        %v1256 = vrot.slane %v1255, 1
        %v1257 = vmin.f32 %v1255, %v1256
        %1258 = vst [vmem:[%s323] sm:$0x1] %v1257
        %1259 = vst [vmem:[#allocation2] sm:$0xff] %v1221
        %1260 = vst [vmem:[#allocation2 + $0x8] sm:$0xff] %v1222
        %1261 = vst [vmem:[#allocation2 + $0x10] sm:$0xff] %v1223
        %1262 = vst [vmem:[#allocation2 + $0x18] sm:$0xff] %v1224
        %1263 = vst [vmem:[#allocation2 + $0x20] sm:$0xff] %v1225
        %1264 = vst [vmem:[#allocation2 + $0x28] sm:$0xff] %v1226
        %1265 = vst [vmem:[#allocation2 + $0x30] sm:$0xff] %v1227
        %1266 = vst [vmem:[#allocation2 + $0x38] sm:$0xff] %v1228
        %1267 = vst [vmem:[#allocation2 + $0x40] sm:$0xff] %v1229
        %1268 = vst [vmem:[#allocation2 + $0x48] sm:$0xff] %v1230
        %1269 = vst [vmem:[#allocation2 + $0x50] sm:$0xff] %v1231
        %1270 = vst [vmem:[#allocation2 + $0x58] sm:$0xff] %v1232
        %1271 = vst [vmem:[#allocation2 + $0x60] sm:$0xff] %v1233
        %1272 = vst [vmem:[#allocation2 + $0x68] sm:$0xff] %v1234
        %1273 = vst [vmem:[#allocation2 + $0x70] sm:$0xff] %v1235
        %1274 = vst [vmem:[#allocation2 + $0x78] sm:$0xff] %v1236
        // Predicated region
        $region41: #{tpu_custom_call.1} parent=35 // pred_check
          %p1275 = pneg %p355
        $region42: #{tpu_custom_call.1} parent=35 // pred_check_branch
          %1277 = sbr.rel (%p1275) target = $region44
        $region43: #{tpu_custom_call.1} parent=35 // pred_region
          %v1278 = vld [vmem:[#allocation2] sm:$0xff]
          %v1279 = vld [vmem:[#allocation2 + $0x8] sm:$0xff]
          %v1280 = vld [vmem:[#allocation2 + $0x10] sm:$0xff]
          %v1281 = vld [vmem:[#allocation2 + $0x18] sm:$0xff]
          %v1282 = vld [vmem:[#allocation2 + $0x20] sm:$0xff]
          %v1283 = vld [vmem:[#allocation2 + $0x28] sm:$0xff]
          %v1284 = vld [vmem:[#allocation2 + $0x30] sm:$0xff]
          %v1285 = vld [vmem:[#allocation2 + $0x38] sm:$0xff]
          %v1286 = vld [vmem:[#allocation2 + $0x40] sm:$0xff]
          %v1287 = vld [vmem:[#allocation2 + $0x48] sm:$0xff]
          %v1288 = vld [vmem:[#allocation2 + $0x50] sm:$0xff]
          %v1289 = vld [vmem:[#allocation2 + $0x58] sm:$0xff]
          %v1290 = vld [vmem:[#allocation2 + $0x60] sm:$0xff]
          %v1291 = vld [vmem:[#allocation2 + $0x68] sm:$0xff]
          %v1292 = vld [vmem:[#allocation2 + $0x70] sm:$0xff]
          %v1293 = vld [vmem:[#allocation2 + $0x78] sm:$0xff]
          %1294 = vmin.xlane.f32.xlu0 %v1278
          %v1295 = vpop.xlane.xlu0 %1294
          %1296 = vmin.xlane.f32.xlu0 %v1279
          %v1297 = vpop.xlane.xlu0 %1296
          %1298 = vmin.xlane.f32.xlu0 %v1280
          %v1299 = vpop.xlane.xlu0 %1298
          %1300 = vmin.xlane.f32.xlu0 %v1281
          %v1301 = vpop.xlane.xlu0 %1300
          %1302 = vmin.xlane.f32.xlu0 %v1282
          %v1303 = vpop.xlane.xlu0 %1302
          %1304 = vmin.xlane.f32.xlu0 %v1283
          %v1305 = vpop.xlane.xlu0 %1304
          %1306 = vmin.xlane.f32.xlu0 %v1284
          %v1307 = vpop.xlane.xlu0 %1306
          %1308 = vmin.xlane.f32.xlu0 %v1285
          %v1309 = vpop.xlane.xlu0 %1308
          %1310 = vmin.xlane.f32.xlu0 %v1286
          %v1311 = vpop.xlane.xlu0 %1310
          %1312 = vmin.xlane.f32.xlu0 %v1287
          %v1313 = vpop.xlane.xlu0 %1312
          %1314 = vmin.xlane.f32.xlu0 %v1288
          %v1315 = vpop.xlane.xlu0 %1314
          %1316 = vmin.xlane.f32.xlu0 %v1289
          %v1317 = vpop.xlane.xlu0 %1316
          %1318 = vmin.xlane.f32.xlu0 %v1290
          %v1319 = vpop.xlane.xlu0 %1318
          %1320 = vmin.xlane.f32.xlu0 %v1291
          %v1321 = vpop.xlane.xlu0 %1320
          %1322 = vmin.xlane.f32.xlu0 %v1292
          %v1323 = vpop.xlane.xlu0 %1322
          %1324 = vmin.xlane.f32.xlu0 %v1293
          %v1325 = vpop.xlane.xlu0 %1324
          %v1326 = vmax.f32 %v1295, 0.0
          %v1327 = vmax.f32 %v1297, 0.0
          %v1328 = vmax.f32 %v1299, 0.0
          %v1329 = vmax.f32 %v1301, 0.0
          %v1330 = vmax.f32 %v1303, 0.0
          %v1331 = vmax.f32 %v1305, 0.0
          %v1332 = vmax.f32 %v1307, 0.0
          %v1333 = vmax.f32 %v1309, 0.0
          %v1334 = vmax.f32 %v1311, 0.0
          %v1335 = vmax.f32 %v1313, 0.0
          %v1336 = vmax.f32 %v1315, 0.0
          %v1337 = vmax.f32 %v1317, 0.0
          %v1338 = vmax.f32 %v1319, 0.0
          %v1339 = vmax.f32 %v1321, 0.0
          %v1340 = vmax.f32 %v1323, 0.0
          %v1341 = vmax.f32 %v1325, 0.0
          %v1342 = vrsqrt.pop %v1326
          %v1343 = vmul.f32 %v1342, %v1326
          %v1344 = vmul.f32 %v1343, %v1342
          %v1345 = vmul.f32 0.5, %v1344
          %v1346 = vsub.f32 1.5, %v1345
          %v1347 = vmul.f32 %v1342, %v1346
          %v1348 = vmul.f32 %v1326, %v1347
          %vm1349 = vcmp.eq.f32.partialorder %v1326, inf
          %v1350 = vsel %vm1349, %v1326, %v1348
          %vm1351 = vcmp.eq.f32.partialorder %v1326, 0.0
          %v1352 = vand.u32 %v1326, 2147483648
          %v1353 = vsel %vm1351, %v1352, %v1350
          %v1354 = vrsqrt.pop %v1327
          %v1355 = vmul.f32 %v1354, %v1327
          %v1356 = vmul.f32 %v1355, %v1354
          %v1357 = vmul.f32 0.5, %v1356
          %v1358 = vsub.f32 1.5, %v1357
          %v1359 = vmul.f32 %v1354, %v1358
          %v1360 = vmul.f32 %v1327, %v1359
          %vm1361 = vcmp.eq.f32.partialorder %v1327, inf
          %v1362 = vsel %vm1361, %v1327, %v1360
          %vm1363 = vcmp.eq.f32.partialorder %v1327, 0.0
          %v1364 = vand.u32 %v1327, 2147483648
          %v1365 = vsel %vm1363, %v1364, %v1362
          %v1366 = vrsqrt.pop %v1328
          %v1367 = vmul.f32 %v1366, %v1328
          %v1368 = vmul.f32 %v1367, %v1366
          %v1369 = vmul.f32 0.5, %v1368
          %v1370 = vsub.f32 1.5, %v1369
          %v1371 = vmul.f32 %v1366, %v1370
          %v1372 = vmul.f32 %v1328, %v1371
          %vm1373 = vcmp.eq.f32.partialorder %v1328, inf
          %v1374 = vsel %vm1373, %v1328, %v1372
          %vm1375 = vcmp.eq.f32.partialorder %v1328, 0.0
          %v1376 = vand.u32 %v1328, 2147483648
          %v1377 = vsel %vm1375, %v1376, %v1374
          %v1378 = vrsqrt.pop %v1329
          %v1379 = vmul.f32 %v1378, %v1329
          %v1380 = vmul.f32 %v1379, %v1378
          %v1381 = vmul.f32 0.5, %v1380
          %v1382 = vsub.f32 1.5, %v1381
          %v1383 = vmul.f32 %v1378, %v1382
          %v1384 = vmul.f32 %v1329, %v1383
          %vm1385 = vcmp.eq.f32.partialorder %v1329, inf
          %v1386 = vsel %vm1385, %v1329, %v1384
          %vm1387 = vcmp.eq.f32.partialorder %v1329, 0.0
          %v1388 = vand.u32 %v1329, 2147483648
          %v1389 = vsel %vm1387, %v1388, %v1386
          %v1390 = vrsqrt.pop %v1330
          %v1391 = vmul.f32 %v1390, %v1330
          %v1392 = vmul.f32 %v1391, %v1390
          %v1393 = vmul.f32 0.5, %v1392
          %v1394 = vsub.f32 1.5, %v1393
          %v1395 = vmul.f32 %v1390, %v1394
          %v1396 = vmul.f32 %v1330, %v1395
          %vm1397 = vcmp.eq.f32.partialorder %v1330, inf
          %v1398 = vsel %vm1397, %v1330, %v1396
          %vm1399 = vcmp.eq.f32.partialorder %v1330, 0.0
          %v1400 = vand.u32 %v1330, 2147483648
          %v1401 = vsel %vm1399, %v1400, %v1398
          %v1402 = vrsqrt.pop %v1331
          %v1403 = vmul.f32 %v1402, %v1331
          %v1404 = vmul.f32 %v1403, %v1402
          %v1405 = vmul.f32 0.5, %v1404
          %v1406 = vsub.f32 1.5, %v1405
          %v1407 = vmul.f32 %v1402, %v1406
          %v1408 = vmul.f32 %v1331, %v1407
          %vm1409 = vcmp.eq.f32.partialorder %v1331, inf
          %v1410 = vsel %vm1409, %v1331, %v1408
          %vm1411 = vcmp.eq.f32.partialorder %v1331, 0.0
          %v1412 = vand.u32 %v1331, 2147483648
          %v1413 = vsel %vm1411, %v1412, %v1410
          %v1414 = vrsqrt.pop %v1332
          %v1415 = vmul.f32 %v1414, %v1332
          %v1416 = vmul.f32 %v1415, %v1414
          %v1417 = vmul.f32 0.5, %v1416
          %v1418 = vsub.f32 1.5, %v1417
          %v1419 = vmul.f32 %v1414, %v1418
          %v1420 = vmul.f32 %v1332, %v1419
          %vm1421 = vcmp.eq.f32.partialorder %v1332, inf
          %v1422 = vsel %vm1421, %v1332, %v1420
          %vm1423 = vcmp.eq.f32.partialorder %v1332, 0.0
          %v1424 = vand.u32 %v1332, 2147483648
          %v1425 = vsel %vm1423, %v1424, %v1422
          %v1426 = vrsqrt.pop %v1333
          %v1427 = vmul.f32 %v1426, %v1333
          %v1428 = vmul.f32 %v1427, %v1426
          %v1429 = vmul.f32 0.5, %v1428
          %v1430 = vsub.f32 1.5, %v1429
          %v1431 = vmul.f32 %v1426, %v1430
          %v1432 = vmul.f32 %v1333, %v1431
          %vm1433 = vcmp.eq.f32.partialorder %v1333, inf
          %v1434 = vsel %vm1433, %v1333, %v1432
          %vm1435 = vcmp.eq.f32.partialorder %v1333, 0.0
          %v1436 = vand.u32 %v1333, 2147483648
          %v1437 = vsel %vm1435, %v1436, %v1434
          %v1438 = vrsqrt.pop %v1334
          %v1439 = vmul.f32 %v1438, %v1334
          %v1440 = vmul.f32 %v1439, %v1438
          %v1441 = vmul.f32 0.5, %v1440
          %v1442 = vsub.f32 1.5, %v1441
          %v1443 = vmul.f32 %v1438, %v1442
          %v1444 = vmul.f32 %v1334, %v1443
          %vm1445 = vcmp.eq.f32.partialorder %v1334, inf
          %v1446 = vsel %vm1445, %v1334, %v1444
          %vm1447 = vcmp.eq.f32.partialorder %v1334, 0.0
          %v1448 = vand.u32 %v1334, 2147483648
          %v1449 = vsel %vm1447, %v1448, %v1446
          %v1450 = vrsqrt.pop %v1335
          %v1451 = vmul.f32 %v1450, %v1335
          %v1452 = vmul.f32 %v1451, %v1450
          %v1453 = vmul.f32 0.5, %v1452
          %v1454 = vsub.f32 1.5, %v1453
          %v1455 = vmul.f32 %v1450, %v1454
          %v1456 = vmul.f32 %v1335, %v1455
          %vm1457 = vcmp.eq.f32.partialorder %v1335, inf
          %v1458 = vsel %vm1457, %v1335, %v1456
          %vm1459 = vcmp.eq.f32.partialorder %v1335, 0.0
          %v1460 = vand.u32 %v1335, 2147483648
          %v1461 = vsel %vm1459, %v1460, %v1458
          %v1462 = vrsqrt.pop %v1336
          %v1463 = vmul.f32 %v1462, %v1336
          %v1464 = vmul.f32 %v1463, %v1462
          %v1465 = vmul.f32 0.5, %v1464
          %v1466 = vsub.f32 1.5, %v1465
          %v1467 = vmul.f32 %v1462, %v1466
          %v1468 = vmul.f32 %v1336, %v1467
          %vm1469 = vcmp.eq.f32.partialorder %v1336, inf
          %v1470 = vsel %vm1469, %v1336, %v1468
          %vm1471 = vcmp.eq.f32.partialorder %v1336, 0.0
          %v1472 = vand.u32 %v1336, 2147483648
          %v1473 = vsel %vm1471, %v1472, %v1470
          %v1474 = vrsqrt.pop %v1337
          %v1475 = vmul.f32 %v1474, %v1337
          %v1476 = vmul.f32 %v1475, %v1474
          %v1477 = vmul.f32 0.5, %v1476
          %v1478 = vsub.f32 1.5, %v1477
          %v1479 = vmul.f32 %v1474, %v1478
          %v1480 = vmul.f32 %v1337, %v1479
          %vm1481 = vcmp.eq.f32.partialorder %v1337, inf
          %v1482 = vsel %vm1481, %v1337, %v1480
          %vm1483 = vcmp.eq.f32.partialorder %v1337, 0.0
          %v1484 = vand.u32 %v1337, 2147483648
          %v1485 = vsel %vm1483, %v1484, %v1482
          %v1486 = vrsqrt.pop %v1338
          %v1487 = vmul.f32 %v1486, %v1338
          %v1488 = vmul.f32 %v1487, %v1486
          %v1489 = vmul.f32 0.5, %v1488
          %v1490 = vsub.f32 1.5, %v1489
          %v1491 = vmul.f32 %v1486, %v1490
          %v1492 = vmul.f32 %v1338, %v1491
          %vm1493 = vcmp.eq.f32.partialorder %v1338, inf
          %v1494 = vsel %vm1493, %v1338, %v1492
          %vm1495 = vcmp.eq.f32.partialorder %v1338, 0.0
          %v1496 = vand.u32 %v1338, 2147483648
          %v1497 = vsel %vm1495, %v1496, %v1494
          %v1498 = vrsqrt.pop %v1339
          %v1499 = vmul.f32 %v1498, %v1339
          %v1500 = vmul.f32 %v1499, %v1498
          %v1501 = vmul.f32 0.5, %v1500
          %v1502 = vsub.f32 1.5, %v1501
          %v1503 = vmul.f32 %v1498, %v1502
          %v1504 = vmul.f32 %v1339, %v1503
          %vm1505 = vcmp.eq.f32.partialorder %v1339, inf
          %v1506 = vsel %vm1505, %v1339, %v1504
          %vm1507 = vcmp.eq.f32.partialorder %v1339, 0.0
          %v1508 = vand.u32 %v1339, 2147483648
          %v1509 = vsel %vm1507, %v1508, %v1506
          %v1510 = vrsqrt.pop %v1340
          %v1511 = vmul.f32 %v1510, %v1340
          %v1512 = vmul.f32 %v1511, %v1510
          %v1513 = vmul.f32 0.5, %v1512
          %v1514 = vsub.f32 1.5, %v1513
          %v1515 = vmul.f32 %v1510, %v1514
          %v1516 = vmul.f32 %v1340, %v1515
          %vm1517 = vcmp.eq.f32.partialorder %v1340, inf
          %v1518 = vsel %vm1517, %v1340, %v1516
          %vm1519 = vcmp.eq.f32.partialorder %v1340, 0.0
          %v1520 = vand.u32 %v1340, 2147483648
          %v1521 = vsel %vm1519, %v1520, %v1518
          %v1522 = vrsqrt.pop %v1341
          %v1523 = vmul.f32 %v1522, %v1341
          %v1524 = vmul.f32 %v1523, %v1522
          %v1525 = vmul.f32 0.5, %v1524
          %v1526 = vsub.f32 1.5, %v1525
          %v1527 = vmul.f32 %v1522, %v1526
          %v1528 = vmul.f32 %v1341, %v1527
          %vm1529 = vcmp.eq.f32.partialorder %v1341, inf
          %v1530 = vsel %vm1529, %v1341, %v1528
          %vm1531 = vcmp.eq.f32.partialorder %v1341, 0.0
          %v1532 = vand.u32 %v1341, 2147483648
          %v1533 = vsel %vm1531, %v1532, %v1530
          %v1550 = vlaneseq
          %v1551 = vand.u32 %v1550, 127
          %v1552 = vperm.slane %v1353, %v1551
          %v1553 = vadd.s32 %v1551, 4294967288
          %v1554 = vperm.slane %v1365, %v1553
          %vm1555 = vcmask 130112
          %v1556 = vsel %vm1555, %v1554, %v1552
          %v1557 = vadd.s32 %v1551, 4294967280
          %v1558 = vperm.slane %v1377, %v1557
          %vm1559 = vcmask 195712
          %v1560 = vsel %vm1559, %v1558, %v1556
          %v1561 = vadd.s32 %v1551, 4294967272
          %v1562 = vperm.slane %v1389, %v1561
          %vm1563 = vcmask 261312
          %v1564 = vsel %vm1563, %v1562, %v1560
          %v1565 = vadd.s32 %v1551, 4294967264
          %v1566 = vperm.slane %v1401, %v1565
          %vm1567 = vcmask 326912
          %v1568 = vsel %vm1567, %v1566, %v1564
          %v1569 = vadd.s32 %v1551, 4294967256
          %v1570 = vperm.slane %v1413, %v1569
          %vm1571 = vcmask 392512
          %v1572 = vsel %vm1571, %v1570, %v1568
          %v1573 = vadd.s32 %v1551, 4294967248
          %v1574 = vperm.slane %v1425, %v1573
          %vm1575 = vcmask 458112
          %v1576 = vsel %vm1575, %v1574, %v1572
          %v1577 = vadd.s32 %v1551, 4294967240
          %v1578 = vperm.slane %v1437, %v1577
          %vm1579 = vcmask 523712
          %v1580 = vsel %vm1579, %v1578, %v1576
          %v1581 = vadd.s32 %v1551, 4294967232
          %v1582 = vperm.slane %v1449, %v1581
          %vm1583 = vcmask 589312
          %v1584 = vsel %vm1583, %v1582, %v1580
          %v1585 = vadd.s32 %v1551, 4294967224
          %v1586 = vperm.slane %v1461, %v1585
          %vm1587 = vcmask 654912
          %v1588 = vsel %vm1587, %v1586, %v1584
          %v1589 = vadd.s32 %v1551, 4294967216
          %v1590 = vperm.slane %v1473, %v1589
          %vm1591 = vcmask 720512
          %v1592 = vsel %vm1591, %v1590, %v1588
          %v1593 = vadd.s32 %v1551, 4294967208
          %v1594 = vperm.slane %v1485, %v1593
          %vm1595 = vcmask 786112
          %v1596 = vsel %vm1595, %v1594, %v1592
          %v1597 = vadd.s32 %v1551, 4294967200
          %v1598 = vperm.slane %v1497, %v1597
          %vm1599 = vcmask 851712
          %v1600 = vsel %vm1599, %v1598, %v1596
          %v1601 = vadd.s32 %v1551, 4294967192
          %v1602 = vperm.slane %v1509, %v1601
          %vm1603 = vcmask 917312
          %v1604 = vsel %vm1603, %v1602, %v1600
          %v1605 = vadd.s32 %v1551, 4294967184
          %v1606 = vperm.slane %v1521, %v1605
          %vm1607 = vcmask 982912
          %v1608 = vsel %vm1607, %v1606, %v1604
          %v1609 = vadd.s32 %v1551, 4294967176
          %v1610 = vperm.slane %v1533, %v1609
          %vm1611 = vcmask 1048512
          %v1612 = vsel %vm1611, %v1610, %v1608
          %1614 = vst [vmem:[%s317] sm:$0x1] %v1612
        $region44: #{tpu_custom_call.1} parent=35 // pred_fallthru
          _
        %s1615 = sand.u32 %s164, 1
        %s1616 = scalar_lea.sflag [#allocation4], %s1615
        %s1617 = sand.u32 %s164, 1
        %s1618 = scalar_lea.vmem [#allocation3], %s1617
        %s1619 = sand.u32 %s194, 1
        %s1620 = scalar_lea.sflag [#allocation6], %s1619
        %s1621 = sand.u32 %s194, 1
        %s1622 = scalar_lea.vmem [#allocation5], %s1621
        // Predicated region
        $region45: #{tpu_custom_call.1} parent=35 // pred_check
          %p1623 = pneg %p174
        $region46: #{tpu_custom_call.1} parent=35 // pred_check_branch
          %1625 = sbr.rel (%p1623) target = $region48
        $region47: #{tpu_custom_call.1} parent=35 // pred_region
          %1627 = vsyncadd %s1616, 0
          %s1628 = sadd.s32 %s29, %s28
          %s1629 = scalar_lea.hbm %s4, %s1628
          %s1631 = sshll.u32 %s1618, 4
          %s1632 = int_to_ptr.vmem [resolvable:$true] %s1631
          %s1633 = sshll.u32 %s1629, 4
          %s1634 = int_to_ptr.hbm [resolvable:$true] %s1633
          %1636 = dma.vmem_to_hbm [thread:$0]  %s1632, 16, %s1634, %s1616
        $region48: #{tpu_custom_call.1} parent=35 // pred_fallthru
          _
        // Predicated region
        $region49: #{tpu_custom_call.1} parent=35 // pred_check
          %p1637 = pneg %p204
        $region50: #{tpu_custom_call.1} parent=35 // pred_check_branch
          %1639 = sbr.rel (%p1637) target = $region52
        $region51: #{tpu_custom_call.1} parent=35 // pred_region
          %s1640 = sadd.s32 %s29, %s30
          %1642 = vsyncadd %s1620, 0
          %s1643 = sadd.s32 %s1640, %s28
          %s1644 = scalar_lea.hbm %s5, %s1643
          %s1646 = sshll.u32 %s1622, 4
          %s1647 = int_to_ptr.vmem [resolvable:$true] %s1646
          %s1648 = sshll.u32 %s1644, 4
          %s1649 = int_to_ptr.hbm [resolvable:$true] %s1648
          %1651 = dma.vmem_to_hbm [thread:$0]  %s1647, 16, %s1649, %s1620
        $region52: #{tpu_custom_call.1} parent=35 // pred_fallthru
          _
      $region36: #{tpu_custom_call.1} parent=5 // pred_fallthru
        _
      %p1652 = scmp.le.s32.totalorder 2, %s18
      // Predicated region
      $region53: #{tpu_custom_call.1} parent=5 // pred_check
        %p1653 = pneg %p1652
      $region54: #{tpu_custom_call.1} parent=5 // pred_check_branch
        %1655 = sbr.rel (%p1653) target = $region56
      $region55: #{tpu_custom_call.1} parent=5 // pred_region
        %s1656 = ssub.s32 %s18, 2
        // Predicated region
        $region57: #{tpu_custom_call.1} parent=55 // pred_check
          %p1657 = pneg %p180
        $region58: #{tpu_custom_call.1} parent=55 // pred_check_branch
          %1659 = sbr.rel (%p1657) target = $region60
        $region59: #{tpu_custom_call.1} parent=55 // pred_region
          %s1660 = sand.u32 %s165, 1
          %s1661 = scalar_lea.sflag [#allocation4], %s1660
          %s1662 = sand.u32 %s165, 1
          %s1663 = scalar_lea.vmem [#allocation3], %s1662
          %1665 = dma.done %s1661, 16
        $region60: #{tpu_custom_call.1} parent=55 // pred_fallthru
          _
        // Predicated region
        $region61: #{tpu_custom_call.1} parent=55 // pred_check
          %p1666 = pneg %p210
        $region62: #{tpu_custom_call.1} parent=55 // pred_check_branch
          %1668 = sbr.rel (%p1666) target = $region64
        $region63: #{tpu_custom_call.1} parent=55 // pred_region
          %s1669 = sand.u32 %s195, 1
          %s1670 = scalar_lea.sflag [#allocation6], %s1669
          %s1671 = sand.u32 %s195, 1
          %s1672 = scalar_lea.vmem [#allocation5], %s1671
          %1674 = dma.done %s1670, 16
        $region64: #{tpu_custom_call.1} parent=55 // pred_fallthru
          _
      $region56: #{tpu_custom_call.1} parent=5 // pred_fallthru
        _
    $region6: #{tpu_custom_call.1} parent=1 // loop_footer
      %s22 = sadd.s32 1, %s18
    $region7: #{tpu_custom_call.1} parent=1 // loop_footer_branch
      %17 = sbr.rel target = $region3
    $region8: #{tpu_custom_call.1} parent=1 // loop_exit
      _
    %1675 = vsyncpa [#allocation4], 1
    %s1676 = scalar_lea.sflag [#allocation4], 1
    %1677 = vsyncpa %s1676, 1
    %1678 = vsyncpa [#allocation6], 1
    %s1679 = scalar_lea.sflag [#allocation6], 1
    %1680 = vsyncpa %s1679, 1

</llo_original>
